<compile_context>
chip_gen: v7x
topology: tpu7x:2x2x1
jax: 0.10.0
libtpu: 0.0.40
codegen_flags: <defaults>
</compile_context>

<pallas_src>
import jax
import jax.numpy as jnp
from jax.experimental import pallas as pl
from jax.experimental.pallas import tpu as pltpu


def _round_up(x: int, m: int) -> int:
    return ((x + m - 1) // m) * m


# ---------------------------------------------------------------------------
# Kernels: one (row-tile, tap) grid step.
#   acc += x_tap @ w_tap ;  at last tap:  y = silu(acc*scale + bias) [+ res]
# ---------------------------------------------------------------------------
def _conv_bn_silu_kernel(x_ref, w_ref, scale_ref, bias_ref, o_ref, acc_ref):
    t = pl.program_id(1)

    @pl.when(t == 0)
    def _():
        acc_ref[...] = jnp.zeros_like(acc_ref)

    acc_ref[...] += jnp.dot(x_ref[0], w_ref[0],
                            preferred_element_type=jnp.float32)

    @pl.when(t == pl.num_programs(1) - 1)
    def _():
        y = acc_ref[...] * scale_ref[...] + bias_ref[...]
        y = y * (1.0 / (1.0 + jnp.exp(-y)))          # SiLU
        o_ref[...] = y.astype(o_ref.dtype)


def _conv_bn_silu_res_kernel(x_ref, w_ref, scale_ref, bias_ref, res_ref,
                             o_ref, acc_ref):
    t = pl.program_id(1)

    @pl.when(t == 0)
    def _():
        acc_ref[...] = jnp.zeros_like(acc_ref)

    acc_ref[...] += jnp.dot(x_ref[0], w_ref[0],
                            preferred_element_type=jnp.float32)

    @pl.when(t == pl.num_programs(1) - 1)
    def _():
        y = acc_ref[...] * scale_ref[...] + bias_ref[...]
        y = y * (1.0 / (1.0 + jnp.exp(-y)))          # SiLU
        o_ref[...] = (y + res_ref[...].astype(jnp.float32)).astype(o_ref.dtype)


# ---------------------------------------------------------------------------
# Fused KxK 'same' conv (stride 1, groups=1) + folded BN + SiLU (+ residual).
# ---------------------------------------------------------------------------
def conv_bn_silu(x_nhwc, w, scale, bias, residual=None, *, tile_m=256):
    N, H, W, Cin = x_nhwc.shape
    K = w.shape[0]
    Cout = w.shape[-1]
    pad = K // 2
    T = K * K
    M = N * H * W

    # Lane-dense channel padding (multiple of 128): unmasked vector stores,
    # clean MXU tiles.  Zero-padded channels do not change the result.
    cin_p = _round_up(Cin, 128)
    cout_p = _round_up(Cout, 128)

    xp = jnp.pad(x_nhwc, ((0, 0), (pad, pad), (pad, pad), (0, cin_p - Cin)))

    # KxK conv == sum over K*K taps of shifted 1x1 convs (matmuls).
    taps = [xp[:, kh:kh + H, kw:kw + W, :].reshape(M, cin_p)
            for kh in range(K) for kw in range(K)]
    x_taps = jnp.stack(taps, axis=0)                                # (T, M, Cin_p)
    w_taps = jnp.pad(
        w, ((0, 0), (0, 0), (0, cin_p - Cin), (0, cout_p - Cout))
    ).reshape(T, cin_p, cout_p)                                     # (T, Cin_p, Cout_p)

    tm = min(tile_m, _round_up(M, 8))
    m_pad = _round_up(M, tm)
    if m_pad != M:
        x_taps = jnp.pad(x_taps, ((0, 0), (0, m_pad - M), (0, 0)))

    scale2 = jnp.pad(scale.astype(jnp.float32), (0, cout_p - Cout)).reshape(1, cout_p)
    bias2 = jnp.pad(bias.astype(jnp.float32), (0, cout_p - Cout)).reshape(1, cout_p)

    in_specs = [
        pl.BlockSpec((1, tm, cin_p), lambda i, t: (t, i, 0)),       # activation taps
        pl.BlockSpec((1, cin_p, cout_p), lambda i, t: (t, 0, 0)),   # per-tap weights
        pl.BlockSpec((1, cout_p), lambda i, t: (0, 0)),             # BN scale
        pl.BlockSpec((1, cout_p), lambda i, t: (0, 0)),             # BN bias
    ]
    args = [x_taps, w_taps, scale2, bias2]
    kernel = _conv_bn_silu_kernel

    if residual is not None:
        res2 = jnp.pad(residual.reshape(M, Cout),
                       ((0, m_pad - M), (0, cout_p - Cout)))
        in_specs.append(pl.BlockSpec((tm, cout_p), lambda i, t: (i, 0)))
        args.append(res2)
        kernel = _conv_bn_silu_res_kernel

    out = pl.pallas_call(
        kernel,
        out_shape=jax.ShapeDtypeStruct((m_pad, cout_p), x_nhwc.dtype),
        grid_spec=pltpu.PrefetchScalarGridSpec(
            num_scalar_prefetch=0,
            grid=(m_pad // tm, T),                  # reduction (tap) axis last
            in_specs=in_specs,
            out_specs=pl.BlockSpec((tm, cout_p), lambda i, t: (i, 0)),
            scratch_shapes=[pltpu.VMEM((tm, cout_p), jnp.float32)],
        ),
        compiler_params=pltpu.CompilerParams(
            dimension_semantics=("parallel", "arbitrary"),
        ),
    )(*args)

    return out[:M, :Cout].reshape(N, H, W, Cout)


# ---------------------------------------------------------------------------
# Bottleneck module
# ---------------------------------------------------------------------------
def fold_bn(gamma, beta, mean, var, eps=1e-3):
    scale = gamma / jnp.sqrt(var + eps)
    return scale, beta - mean * scale


def init_bottleneck_params(key, c1, c2, e=0.5, k=(3, 3)):
    c_ = int(c2 * e)
    k1, k2, k3, k4 = jax.random.split(key, 4)
    # Quantize weights to bf16 grid (kept in f32) so kernel/reference matmul
    # results are insensitive to MXU pass count.
    w1 = (jax.random.normal(k1, (k[0], k[0], c1, c_), jnp.float32) * 0.1
          ).astype(jnp.bfloat16).astype(jnp.float32)
    w2 = (jax.random.normal(k2, (k[1], k[1], c_, c2), jnp.float32) * 0.1
          ).astype(jnp.bfloat16).astype(jnp.float32)
    g1 = 1.0 + 0.1 * jax.random.normal(k3, (c_,), jnp.float32)
    b1 = 0.05 * jnp.arange(c_, dtype=jnp.float32)
    m1 = 0.02 * jnp.arange(c_, dtype=jnp.float32)
    v1 = jnp.ones((c_,), jnp.float32) * 0.9
    g2 = 1.0 + 0.1 * jax.random.normal(k4, (c2,), jnp.float32)
    b2 = -0.03 * jnp.arange(c2, dtype=jnp.float32)
    m2 = 0.01 * jnp.arange(c2, dtype=jnp.float32)
    v2 = jnp.ones((c2,), jnp.float32) * 1.1
    s1, bb1 = fold_bn(g1, b1, m1, v1)
    s2, bb2 = fold_bn(g2, b2, m2, v2)
    return dict(w1=w1, scale1=s1, bias1=bb1, w2=w2, scale2=s2, bias2=bb2)


def bottleneck(x_nchw, params, *, shortcut=True, g=1):
    """Bottleneck forward: x + cv2(cv1(x)) if (shortcut and c1==c2)."""
    # TODO(synk): grouped conv (g > 1) not implemented; Bottleneck default is g=1.
    assert g == 1, "grouped conv not supported"
    c1 = x_nchw.shape[1]
    c2 = params["w2"].shape[-1]
    add = shortcut and (c1 == c2)
    x = jnp.transpose(x_nchw, (0, 2, 3, 1))          # NCHW -> NHWC (channels on lanes)
    y = conv_bn_silu(x, params["w1"], params["scale1"], params["bias1"])
    z = conv_bn_silu(y, params["w2"], params["scale2"], params["bias2"],
                     residual=x if add else None)
    return jnp.transpose(z, (0, 3, 1, 2))            # back to NCHW


# ---------------------------------------------------------------------------
# Pure-JAX reference for verification
# ---------------------------------------------------------------------------
def _ref_conv_bn_silu(x, w, scale, bias):
    y = jax.lax.conv_general_dilated(
        x, w, window_strides=(1, 1), padding="SAME",
        dimension_numbers=("NHWC", "HWIO", "NHWC"))
    y = y * scale + bias
    return y * (1.0 / (1.0 + jnp.exp(-y)))


def _ref_bottleneck(x_nchw, params, shortcut=True):
    x = jnp.transpose(x_nchw, (0, 2, 3, 1))
    y = _ref_conv_bn_silu(x, params["w1"], params["scale1"], params["bias1"])
    z = _ref_conv_bn_silu(y, params["w2"], params["scale2"], params["bias2"])
    if shortcut and x.shape[-1] == z.shape[-1]:
        z = z + x
    return jnp.transpose(z, (0, 3, 1, 2))


if __name__ == "__main__":
    key = jax.random.PRNGKey(0)
    kx, kp = jax.random.split(key)

    # NCHW input, matching the PyTorch convention: N=2, C=4, H=W=16.
    x = jax.random.normal(kx, (2, 4, 16, 16), dtype=jnp.float32)
    x = x.astype(jnp.bfloat16).astype(jnp.float32)   # bf16-exact values
    params = init_bottleneck_params(kp, c1=4, c2=4, e=0.5, k=(3, 3))

    fwd = jax.jit(bottleneck, static_argnames=("shortcut", "g"))
    y = fwd(x, params, shortcut=True)
    y = jax.block_until_ready(y)

    ref = _ref_bottleneck(x, params, shortcut=True)
    assert y.shape == x.shape and y.dtype == x.dtype
    assert bool(jnp.all(jnp.isfinite(y)))
    max_err = float(jnp.max(jnp.abs(y - ref)))
    assert max_err < 2e-2, f"max abs err vs reference: {max_err}"

    print("KERNEL_OK")
</pallas_src>

<mosaic_0001>
module attributes {stable_mosaic.version = 11 : i64} {
  func.func @_conv_bn_silu_kernel(%arg0: i32, %arg1: i32, %arg2: memref<1x256x128xf32, #tpu.memory_space<vmem>>, %arg3: memref<1x128x128xf32, #tpu.memory_space<vmem>>, %arg4: memref<1x128xf32, #tpu.memory_space<vmem>>, %arg5: memref<1x128xf32, #tpu.memory_space<vmem>>, %arg6: memref<256x128xf32, #tpu.memory_space<vmem>>, %arg7: memref<256x128xf32, #tpu.memory_space<vmem>>) attributes {dimension_semantics = [#tpu.dimension_semantics<parallel>, #tpu.dimension_semantics<arbitrary>], iteration_bounds = array<i64: 2, 9>, scalar_prefetch = 0 : i64, scratch_operands = 1 : i64, tpu.core_type = #tpu.core_type<tc>, window_params = [{transform_indices = @transform_0, window_bounds = array<i64: 1, 256, 128>}, {transform_indices = @transform_1, window_bounds = array<i64: 1, 128, 128>}, {pipeline_mode = #tpu.pipeline_mode<synchronous>, transform_indices = @transform_2, window_bounds = array<i64: 1, 128>}, {pipeline_mode = #tpu.pipeline_mode<synchronous>, transform_indices = @transform_3, window_bounds = array<i64: 1, 128>}, {transform_indices = @transform_4, window_bounds = array<i64: 256, 128>}]} {
    %c0_i32 = arith.constant 0 : i32
    %0 = arith.cmpi eq, %arg1, %c0_i32 : i32
    %1 = arith.extui %0 : i1 to i32
    %c0_i32_0 = arith.constant 0 : i32
    %2 = arith.cmpi ne, %1, %c0_i32_0 : i32
    scf.if %2 {
      %cst_11 = arith.constant 0.000000e+00 : f32
      %14 = vector.broadcast %cst_11 : f32 to vector<256x128xf32>
      %c0_12 = arith.constant 0 : index
      %c0_13 = arith.constant 0 : index
      %15 = vector.load %arg7[%c0_12, %c0_13] : memref<256x128xf32, #tpu.memory_space<vmem>>, vector<256x128xf32>
      tpu.vector_store %arg7[%c0_12, %c0_13], %14 {strides = array<i32>} : memref<256x128xf32, #tpu.memory_space<vmem>>, vector<256x128xf32>,
    } else {
    }
    %c0 = arith.constant 0 : index
    %c0_1 = arith.constant 0 : index
    %3 = vector.load %arg7[%c0, %c0_1] : memref<256x128xf32, #tpu.memory_space<vmem>>, vector<256x128xf32>
    %c0_2 = arith.constant 0 : index
    %c0_3 = arith.constant 0 : index
    %c0_4 = arith.constant 0 : index
    %4 = vector.load %arg2[%c0_2, %c0_3, %c0_4] : memref<1x256x128xf32, #tpu.memory_space<vmem>>, vector<1x256x128xf32>
    %5 = vector.shape_cast %4 : vector<1x256x128xf32> to vector<256x128xf32>
    %c0_5 = arith.constant 0 : index
    %c0_6 = arith.constant 0 : index
    %c0_7 = arith.constant 0 : index
    %6 = vector.load %arg3[%c0_5, %c0_6, %c0_7] : memref<1x128x128xf32, #tpu.memory_space<vmem>>, vector<1x128x128xf32>
    %7 = vector.shape_cast %6 : vector<1x128x128xf32> to vector<128x128xf32>
    %cst = arith.constant dense<0.000000e+00> : vector<256x128xf32>
    %8 = tpu.matmul %5, %7, %cst {dimension_numbers = #tpu.dot_dimension_numbers<[1], [0], [0], [1], [0, 0, 1, 1], [], []>} : vector<256x128xf32>, vector<128x128xf32>, vector<256x128xf32> -> vector<256x128xf32>
    %9 = arith.addf %3, %8 : vector<256x128xf32>
    %c0_8 = arith.constant 0 : index
    %c0_9 = arith.constant 0 : index
    %10 = vector.load %arg7[%c0_8, %c0_9] : memref<256x128xf32, #tpu.memory_space<vmem>>, vector<256x128xf32>
    tpu.vector_store %arg7[%c0_8, %c0_9], %9 {strides = array<i32>} : memref<256x128xf32, #tpu.memory_space<vmem>>, vector<256x128xf32>,
    %c8_i32 = arith.constant 8 : i32
    %11 = arith.cmpi eq, %arg1, %c8_i32 : i32
    %12 = arith.extui %11 : i1 to i32
    %c0_i32_10 = arith.constant 0 : i32
    %13 = arith.cmpi ne, %12, %c0_i32_10 : i32
    scf.if %13 {
      %c0_11 = arith.constant 0 : index
      %c0_12 = arith.constant 0 : index
      %14 = vector.load %arg7[%c0_11, %c0_12] : memref<256x128xf32, #tpu.memory_space<vmem>>, vector<256x128xf32>
      %c0_13 = arith.constant 0 : index
      %c0_14 = arith.constant 0 : index
      %15 = vector.load %arg4[%c0_13, %c0_14] : memref<1x128xf32, #tpu.memory_space<vmem>>, vector<1x128xf32>
      %16 = vector.broadcast %15 : vector<1x128xf32> to vector<256x128xf32>
      %17 = arith.mulf %14, %16 : vector<256x128xf32>
      %c0_15 = arith.constant 0 : index
      %c0_16 = arith.constant 0 : index
      %18 = vector.load %arg5[%c0_15, %c0_16] : memref<1x128xf32, #tpu.memory_space<vmem>>, vector<1x128xf32>
      %19 = vector.broadcast %18 : vector<1x128xf32> to vector<256x128xf32>
      %20 = arith.addf %17, %19 : vector<256x128xf32>
      %cst_17 = arith.constant 0.000000e+00 : f32
      %21 = vector.broadcast %cst_17 : f32 to vector<256x128xf32>
      %22 = arith.subf %21, %20 : vector<256x128xf32>
      %23 = math.exp %22 : vector<256x128xf32>
      %cst_18 = arith.constant 1.000000e+00 : f32
      %24 = vector.broadcast %cst_18 : f32 to vector<256x128xf32>
      %25 = arith.addf %24, %23 : vector<256x128xf32>
      %cst_19 = arith.constant 1.000000e+00 : f32
      %26 = vector.broadcast %cst_19 : f32 to vector<256x128xf32>
      %27 = arith.divf %26, %25 : vector<256x128xf32>
      %28 = arith.mulf %20, %27 : vector<256x128xf32>
      %c0_20 = arith.constant 0 : index
      %c0_21 = arith.constant 0 : index
      %29 = vector.load %arg6[%c0_20, %c0_21] : memref<256x128xf32, #tpu.memory_space<vmem>>, vector<256x128xf32>
      tpu.vector_store %arg6[%c0_20, %c0_21], %28 {strides = array<i32>} : memref<256x128xf32, #tpu.memory_space<vmem>>, vector<256x128xf32>,
    } else {
    }
    return
  }
  func.func @transform_0(%arg0: i32, %arg1: i32) -> (i32, i32, i32) {
    %c0_i32 = arith.constant 0 : i32
    %c0_i32_0 = arith.constant 0 : i32
    return %arg1, %arg0, %c0_i32 : i32, i32, i32
  }
  func.func @transform_1(%arg0: i32, %arg1: i32) -> (i32, i32, i32) {
    %c0_i32 = arith.constant 0 : i32
    %c0_i32_0 = arith.constant 0 : i32
    %c0_i32_1 = arith.constant 0 : i32
    return %arg1, %c0_i32, %c0_i32_0 : i32, i32, i32
  }
  func.func @transform_2(%arg0: i32, %arg1: i32) -> (i32, i32) {
    %c0_i32 = arith.constant 0 : i32
    %c0_i32_0 = arith.constant 0 : i32
    %c0_i32_1 = arith.constant 0 : i32
    return %c0_i32, %c0_i32_0 : i32, i32
  }
  func.func @transform_3(%arg0: i32, %arg1: i32) -> (i32, i32) {
    %c0_i32 = arith.constant 0 : i32
    %c0_i32_0 = arith.constant 0 : i32
    %c0_i32_1 = arith.constant 0 : i32
    return %c0_i32, %c0_i32_0 : i32, i32
  }
  func.func @transform_4(%arg0: i32, %arg1: i32) -> (i32, i32) {
    %c0_i32 = arith.constant 0 : i32
    %c0_i32_0 = arith.constant 0 : i32
    return %arg0, %c0_i32 : i32, i32
  }
}

module attributes {stable_mosaic.version = 11 : i64} {
  func.func @_conv_bn_silu_res_kernel(%arg0: i32, %arg1: i32, %arg2: memref<1x256x128xf32, #tpu.memory_space<vmem>>, %arg3: memref<1x128x128xf32, #tpu.memory_space<vmem>>, %arg4: memref<1x128xf32, #tpu.memory_space<vmem>>, %arg5: memref<1x128xf32, #tpu.memory_space<vmem>>, %arg6: memref<256x128xf32, #tpu.memory_space<vmem>>, %arg7: memref<256x128xf32, #tpu.memory_space<vmem>>, %arg8: memref<256x128xf32, #tpu.memory_space<vmem>>) attributes {dimension_semantics = [#tpu.dimension_semantics<parallel>, #tpu.dimension_semantics<arbitrary>], iteration_bounds = array<i64: 2, 9>, scalar_prefetch = 0 : i64, scratch_operands = 1 : i64, tpu.core_type = #tpu.core_type<tc>, window_params = [{transform_indices = @transform_0, window_bounds = array<i64: 1, 256, 128>}, {transform_indices = @transform_1, window_bounds = array<i64: 1, 128, 128>}, {pipeline_mode = #tpu.pipeline_mode<synchronous>, transform_indices = @transform_2, window_bounds = array<i64: 1, 128>}, {pipeline_mode = #tpu.pipeline_mode<synchronous>, transform_indices = @transform_3, window_bounds = array<i64: 1, 128>}, {transform_indices = @transform_4, window_bounds = array<i64: 256, 128>}, {transform_indices = @transform_5, window_bounds = array<i64: 256, 128>}]} {
    %c0_i32 = arith.constant 0 : i32
    %0 = arith.cmpi eq, %arg1, %c0_i32 : i32
    %1 = arith.extui %0 : i1 to i32
    %c0_i32_0 = arith.constant 0 : i32
    %2 = arith.cmpi ne, %1, %c0_i32_0 : i32
    scf.if %2 {
      %cst_11 = arith.constant 0.000000e+00 : f32
      %14 = vector.broadcast %cst_11 : f32 to vector<256x128xf32>
      %c0_12 = arith.constant 0 : index
      %c0_13 = arith.constant 0 : index
      %15 = vector.load %arg8[%c0_12, %c0_13] : memref<256x128xf32, #tpu.memory_space<vmem>>, vector<256x128xf32>
      tpu.vector_store %arg8[%c0_12, %c0_13], %14 {strides = array<i32>} : memref<256x128xf32, #tpu.memory_space<vmem>>, vector<256x128xf32>,
    } else {
    }
    %c0 = arith.constant 0 : index
    %c0_1 = arith.constant 0 : index
    %3 = vector.load %arg8[%c0, %c0_1] : memref<256x128xf32, #tpu.memory_space<vmem>>, vector<256x128xf32>
    %c0_2 = arith.constant 0 : index
    %c0_3 = arith.constant 0 : index
    %c0_4 = arith.constant 0 : index
    %4 = vector.load %arg2[%c0_2, %c0_3, %c0_4] : memref<1x256x128xf32, #tpu.memory_space<vmem>>, vector<1x256x128xf32>
    %5 = vector.shape_cast %4 : vector<1x256x128xf32> to vector<256x128xf32>
    %c0_5 = arith.constant 0 : index
    %c0_6 = arith.constant 0 : index
    %c0_7 = arith.constant 0 : index
    %6 = vector.load %arg3[%c0_5, %c0_6, %c0_7] : memref<1x128x128xf32, #tpu.memory_space<vmem>>, vector<1x128x128xf32>
    %7 = vector.shape_cast %6 : vector<1x128x128xf32> to vector<128x128xf32>
    %cst = arith.constant dense<0.000000e+00> : vector<256x128xf32>
    %8 = tpu.matmul %5, %7, %cst {dimension_numbers = #tpu.dot_dimension_numbers<[1], [0], [0], [1], [0, 0, 1, 1], [], []>} : vector<256x128xf32>, vector<128x128xf32>, vector<256x128xf32> -> vector<256x128xf32>
    %9 = arith.addf %3, %8 : vector<256x128xf32>
    %c0_8 = arith.constant 0 : index
    %c0_9 = arith.constant 0 : index
    %10 = vector.load %arg8[%c0_8, %c0_9] : memref<256x128xf32, #tpu.memory_space<vmem>>, vector<256x128xf32>
    tpu.vector_store %arg8[%c0_8, %c0_9], %9 {strides = array<i32>} : memref<256x128xf32, #tpu.memory_space<vmem>>, vector<256x128xf32>,
    %c8_i32 = arith.constant 8 : i32
    %11 = arith.cmpi eq, %arg1, %c8_i32 : i32
    %12 = arith.extui %11 : i1 to i32
    %c0_i32_10 = arith.constant 0 : i32
    %13 = arith.cmpi ne, %12, %c0_i32_10 : i32
    scf.if %13 {
      %c0_11 = arith.constant 0 : index
      %c0_12 = arith.constant 0 : index
      %14 = vector.load %arg8[%c0_11, %c0_12] : memref<256x128xf32, #tpu.memory_space<vmem>>, vector<256x128xf32>
      %c0_13 = arith.constant 0 : index
      %c0_14 = arith.constant 0 : index
      %15 = vector.load %arg4[%c0_13, %c0_14] : memref<1x128xf32, #tpu.memory_space<vmem>>, vector<1x128xf32>
      %16 = vector.broadcast %15 : vector<1x128xf32> to vector<256x128xf32>
      %17 = arith.mulf %14, %16 : vector<256x128xf32>
      %c0_15 = arith.constant 0 : index
      %c0_16 = arith.constant 0 : index
      %18 = vector.load %arg5[%c0_15, %c0_16] : memref<1x128xf32, #tpu.memory_space<vmem>>, vector<1x128xf32>
      %19 = vector.broadcast %18 : vector<1x128xf32> to vector<256x128xf32>
      %20 = arith.addf %17, %19 : vector<256x128xf32>
      %cst_17 = arith.constant 0.000000e+00 : f32
      %21 = vector.broadcast %cst_17 : f32 to vector<256x128xf32>
      %22 = arith.subf %21, %20 : vector<256x128xf32>
      %23 = math.exp %22 : vector<256x128xf32>
      %cst_18 = arith.constant 1.000000e+00 : f32
      %24 = vector.broadcast %cst_18 : f32 to vector<256x128xf32>
      %25 = arith.addf %24, %23 : vector<256x128xf32>
      %cst_19 = arith.constant 1.000000e+00 : f32
      %26 = vector.broadcast %cst_19 : f32 to vector<256x128xf32>
      %27 = arith.divf %26, %25 : vector<256x128xf32>
      %28 = arith.mulf %20, %27 : vector<256x128xf32>
      %c0_20 = arith.constant 0 : index
      %c0_21 = arith.constant 0 : index
      %29 = vector.load %arg6[%c0_20, %c0_21] : memref<256x128xf32, #tpu.memory_space<vmem>>, vector<256x128xf32>
      %30 = arith.addf %28, %29 : vector<256x128xf32>
      %c0_22 = arith.constant 0 : index
      %c0_23 = arith.constant 0 : index
      %31 = vector.load %arg7[%c0_22, %c0_23] : memref<256x128xf32, #tpu.memory_space<vmem>>, vector<256x128xf32>
      tpu.vector_store %arg7[%c0_22, %c0_23], %30 {strides = array<i32>} : memref<256x128xf32, #tpu.memory_space<vmem>>, vector<256x128xf32>,
    } else {
    }
    return
  }
  func.func @transform_0(%arg0: i32, %arg1: i32) -> (i32, i32, i32) {
    %c0_i32 = arith.constant 0 : i32
    %c0_i32_0 = arith.constant 0 : i32
    return %arg1, %arg0, %c0_i32 : i32, i32, i32
  }
  func.func @transform_1(%arg0: i32, %arg1: i32) -> (i32, i32, i32) {
    %c0_i32 = arith.constant 0 : i32
    %c0_i32_0 = arith.constant 0 : i32
    %c0_i32_1 = arith.constant 0 : i32
    return %arg1, %c0_i32, %c0_i32_0 : i32, i32, i32
  }
  func.func @transform_2(%arg0: i32, %arg1: i32) -> (i32, i32) {
    %c0_i32 = arith.constant 0 : i32
    %c0_i32_0 = arith.constant 0 : i32
    %c0_i32_1 = arith.constant 0 : i32
    return %c0_i32, %c0_i32_0 : i32, i32
  }
  func.func @transform_3(%arg0: i32, %arg1: i32) -> (i32, i32) {
    %c0_i32 = arith.constant 0 : i32
    %c0_i32_0 = arith.constant 0 : i32
    %c0_i32_1 = arith.constant 0 : i32
    return %c0_i32, %c0_i32_0 : i32, i32
  }
  func.func @transform_4(%arg0: i32, %arg1: i32) -> (i32, i32) {
    %c0_i32 = arith.constant 0 : i32
    %c0_i32_0 = arith.constant 0 : i32
    return %arg0, %c0_i32 : i32, i32
  }
  func.func @transform_5(%arg0: i32, %arg1: i32) -> (i32, i32) {
    %c0_i32 = arith.constant 0 : i32
    %c0_i32_0 = arith.constant 0 : i32
    return %arg0, %c0_i32 : i32, i32
  }
}

</mosaic_0001>

<llo_original>
// kernel: bottleneck.2
$region0: #{bottleneck.2}
  #allocation0 [shape = 'u32[]', space=smem, size = 0x4, offset = 0x4, fixed_abs, tag = 'smem constant byte address 0x4 - core index']
  #allocation1 [shape = 'u32[144,128]{1,0:T(1,128)}', space=vmem, size = 0x12000, scoped, tag = 'internal scratch']
  #allocation2 [shape = 'f32[256,128]{1,0:T(8,128)}', space=vmem, size = 0x20000, scoped, tag = 'scratch operand']
  %s0 = inlined_call_operand.vmem [shape: f32[9,512,128], index: 0, kind: input, shape index: {}]
  %s1 = inlined_call_operand.vmem [shape: f32[9,128,128], index: 1, kind: input, shape index: {}]
  %s2 = inlined_call_operand.vmem [shape: f32[1,128], index: 2, kind: input, shape index: {}]
  %s3 = inlined_call_operand.vmem [shape: f32[1,128], index: 3, kind: input, shape index: {}]
  %s4 = inlined_call_operand.vmem [shape: f32[512,128], index: 4, kind: output, shape index: {}]
  %s5 = sld [smem:[#allocation0]]
  $region57: #{bottleneck.2} parent=0
    _
  %s7 = ssub.s32 1, %s5
  %s8 = scalar_select 0, %s7, %s5
  loop: start=0, step=1, limit=20
  $region2: #{bottleneck.2} parent=0 // loop_pre_header
    _
  $region3: #{bottleneck.2} parent=0 // loop_header
    %s10 = sphi 0, %s14
    %p11 = scmp.ge.s32.totalorder %s10, 20
    %s17 = sphi 0, %s29
    %s18 = sphi 0, %s25
    %s19 = sphi 0, %s17
    %s20 = sphi 0, %s18
    %s21 = sphi 0, %s19
    %s22 = sphi 0, %s20
    %s34 = sphi 0, %s36
    %s37 = sphi 0, %s34
    %s38 = sphi 0, %s37
    %s54 = sphi 0, %s38
    %s60 = sphi 0, %s62
    %s63 = sphi 0, %s60
    %s64 = sphi 0, %s63
    %s80 = sphi 0, %s64
    %s84 = sphi 0, %s84
    %s86 = sphi 0, %s84
    %s87 = sphi 0, %s86
    %s101 = sphi 0, %s87
    %s105 = sphi 0, %s105
    %s107 = sphi 0, %s105
    %s108 = sphi 0, %s107
    %s122 = sphi 0, %s108
    %s128 = sphi 0, %s130
    %s131 = sphi 0, %s128
    %s132 = sphi 0, %s131
    %s148 = sphi 0, %s132
  $region4: #{bottleneck.2} parent=0 // loop_header_branch
    %13 = sbr.rel (%p11) target = $region8
  $region5: #{bottleneck.2} parent=0 // loop_body
    %s15 = ssub.s32 %s10, 1
    %s16 = ssub.s32 %s10, 2
    %s23 = sadd.s32 1, %s18
    %p24 = scmp.ge.s32.totalorder %s23, 9
    %s25 = scalar_select %p24, 0, %s23
    %s26 = sadd.s32 1, %s17
    %s27 = scalar_select %p24, %s26, %s17
    %p28 = scmp.ge.s32.totalorder %s27, 2
    %s29 = scalar_select %p28, 0, %s27
    %s30 = ssub.s32 %s18, %s25
    %s31 = ssub.s32 %s17, %s29
    %s32 = sor.u32 %s30, %s31
    %p33 = scmp.eq.s32.totalorder %s32, 0
    %s35 = sadd.s32 %s34, 1
    %s36 = scalar_select %p33, %s34, %s35
    %p39 = pneg %p33
    %p40 = scmp.eq.s32.totalorder %s10, 17
    %p41 = por %p39, %p40
    %p42 = scmp.ne.s32.totalorder %s34, %s37
    %p43 = scmp.eq.s32.totalorder %s10, 0
    %p44 = por %p42, %p43
    %p45 = scmp.ne.s32.totalorder %s34, %s37
    %p46 = scmp.eq.s32.totalorder %s15, 17
    %p47 = por %p45, %p46
    %p48 = scmp.ne.s32.totalorder %s37, %s38
    %p49 = scmp.eq.s32.totalorder %s15, 0
    %p50 = por %p48, %p49
    %p51 = scmp.ne.s32.totalorder %s37, %s38
    %p52 = scmp.eq.s32.totalorder %s16, 17
    %p53 = por %p51, %p52
    %p55 = scmp.ne.s32.totalorder %s38, %s54
    %p56 = scmp.eq.s32.totalorder %s16, 0
    %p57 = por %p55, %p56
    %s58 = ssub.s32 %s18, %s25
    %p59 = scmp.eq.s32.totalorder %s58, 0
    %s61 = sadd.s32 %s60, 1
    %s62 = scalar_select %p59, %s60, %s61
    %p65 = pneg %p59
    %p66 = scmp.eq.s32.totalorder %s10, 17
    %p67 = por %p65, %p66
    %p68 = scmp.ne.s32.totalorder %s60, %s63
    %p69 = scmp.eq.s32.totalorder %s10, 0
    %p70 = por %p68, %p69
    %p71 = scmp.ne.s32.totalorder %s60, %s63
    %p72 = scmp.eq.s32.totalorder %s15, 17
    %p73 = por %p71, %p72
    %p74 = scmp.ne.s32.totalorder %s63, %s64
    %p75 = scmp.eq.s32.totalorder %s15, 0
    %p76 = por %p74, %p75
    %p77 = scmp.ne.s32.totalorder %s63, %s64
    %p78 = scmp.eq.s32.totalorder %s16, 17
    %p79 = por %p77, %p78
    %p81 = scmp.ne.s32.totalorder %s64, %s80
    %p82 = scmp.eq.s32.totalorder %s16, 0
    %p83 = por %p81, %p82
    %s85 = sadd.s32 %s84, 1
    %p88 = scmp.eq.s32.totalorder %s10, 17
    %p89 = scmp.ne.s32.totalorder %s84, %s86
    %p90 = scmp.eq.s32.totalorder %s10, 0
    %p91 = por %p89, %p90
    %p92 = scmp.ne.s32.totalorder %s84, %s86
    %p93 = scmp.eq.s32.totalorder %s15, 17
    %p94 = por %p92, %p93
    %p95 = scmp.ne.s32.totalorder %s86, %s87
    %p96 = scmp.eq.s32.totalorder %s15, 0
    %p97 = por %p95, %p96
    %p98 = scmp.ne.s32.totalorder %s86, %s87
    %p99 = scmp.eq.s32.totalorder %s16, 17
    %p100 = por %p98, %p99
    %p102 = scmp.ne.s32.totalorder %s87, %s101
    %p103 = scmp.eq.s32.totalorder %s16, 0
    %p104 = por %p102, %p103
    %s106 = sadd.s32 %s105, 1
    %p109 = scmp.eq.s32.totalorder %s10, 17
    %p110 = scmp.ne.s32.totalorder %s105, %s107
    %p111 = scmp.eq.s32.totalorder %s10, 0
    %p112 = por %p110, %p111
    %p113 = scmp.ne.s32.totalorder %s105, %s107
    %p114 = scmp.eq.s32.totalorder %s15, 17
    %p115 = por %p113, %p114
    %p116 = scmp.ne.s32.totalorder %s107, %s108
    %p117 = scmp.eq.s32.totalorder %s15, 0
    %p118 = por %p116, %p117
    %p119 = scmp.ne.s32.totalorder %s107, %s108
    %p120 = scmp.eq.s32.totalorder %s16, 17
    %p121 = por %p119, %p120
    %p123 = scmp.ne.s32.totalorder %s108, %s122
    %p124 = scmp.eq.s32.totalorder %s16, 0
    %p125 = por %p123, %p124
    %s126 = ssub.s32 %s17, %s29
    %p127 = scmp.eq.s32.totalorder %s126, 0
    %s129 = sadd.s32 %s128, 1
    %s130 = scalar_select %p127, %s128, %s129
    %p133 = pneg %p127
    %p134 = scmp.eq.s32.totalorder %s10, 17
    %p135 = por %p133, %p134
    %p136 = scmp.ne.s32.totalorder %s128, %s131
    %p137 = scmp.eq.s32.totalorder %s10, 0
    %p138 = por %p136, %p137
    %p139 = scmp.ne.s32.totalorder %s128, %s131
    %p140 = scmp.eq.s32.totalorder %s15, 17
    %p141 = por %p139, %p140
    %p142 = scmp.ne.s32.totalorder %s131, %s132
    %p143 = scmp.eq.s32.totalorder %s15, 0
    %p144 = por %p142, %p143
    %p145 = scmp.ne.s32.totalorder %s131, %s132
    %p146 = scmp.eq.s32.totalorder %s16, 17
    %p147 = por %p145, %p146
    %p149 = scmp.ne.s32.totalorder %s132, %s148
    %p150 = scmp.eq.s32.totalorder %s16, 0
    %p151 = por %p149, %p150
    %p152 = scmp.le.s32.totalorder 1, %s10
    %p153 = scmp.lt.s32.totalorder %s10, 19
    %p154 = pnand %p152, %p153
    %p155 = pneg %p154
    // Predicated region
    $region9: #{bottleneck.2} parent=5 // pred_check
      _
    $region10: #{bottleneck.2} parent=5 // pred_check_branch
      %157 = sbr.rel (%p154) target = $region12
    $region11: #{bottleneck.2} parent=5 // pred_region
      %s158 = ssub.s32 %s10, 1
      // Predicated region
      $region13: #{bottleneck.2} parent=11 // pred_check
        %p159 = pneg %p97
      $region14: #{bottleneck.2} parent=11 // pred_check_branch
        %161 = sbr.rel (%p159) target = $region16
      $region15: #{bottleneck.2} parent=11 // pred_region
        _
      $region16: #{bottleneck.2} parent=11 // pred_fallthru
        _
      // Predicated region
      $region17: #{bottleneck.2} parent=11 // pred_check
        %p162 = pneg %p118
      $region18: #{bottleneck.2} parent=11 // pred_check_branch
        %164 = sbr.rel (%p162) target = $region20
      $region19: #{bottleneck.2} parent=11 // pred_region
        _
      $region20: #{bottleneck.2} parent=11 // pred_fallthru
        _
    $region12: #{bottleneck.2} parent=5 // pred_fallthru
      _
    %p165 = scmp.lt.s32.totalorder %s10, 18
    // Predicated region
    $region21: #{bottleneck.2} parent=5 // pred_check
      %p166 = pneg %p165
    $region22: #{bottleneck.2} parent=5 // pred_check_branch
      %168 = sbr.rel (%p166) target = $region24
    $region23: #{bottleneck.2} parent=5 // pred_region
      // Predicated region
      $region25: #{bottleneck.2} parent=23 // pred_check
        %p169 = pneg %p44
      $region26: #{bottleneck.2} parent=23 // pred_check_branch
        %171 = sbr.rel (%p169) target = $region28
      $region27: #{bottleneck.2} parent=23 // pred_region
        %s172 = smul.u32 32, %s17
        %p173 = scmp.lt.s32.totalorder %s18, 8
        %s174 = scalar_select %p173, %s18, 8
        %p175 = scmp.lt.s32.totalorder %s172, 63
        %s176 = scalar_select %p175, %s172, 63
        %s177 = smul.addr %s174, 64
        %s178 = sadd.s32 %s176, %s177
        %s179 = smul.addr %s178, 8
        %s180 = scalar_lea.vmem %s0, %s179
        %s181 = smul.u32 32, %s17
      $region28: #{bottleneck.2} parent=23 // pred_fallthru
        _
      // Predicated region
      $region29: #{bottleneck.2} parent=23 // pred_check
        %p182 = pneg %p70
      $region30: #{bottleneck.2} parent=23 // pred_check_branch
        %184 = sbr.rel (%p182) target = $region32
      $region31: #{bottleneck.2} parent=23 // pred_region
        %p185 = scmp.lt.s32.totalorder %s18, 8
        %s186 = scalar_select %p185, %s18, 8
        %s187 = smul.addr %s186, 16
        %s188 = smul.addr %s187, 8
        %s189 = scalar_lea.vmem %s1, %s188
      $region32: #{bottleneck.2} parent=23 // pred_fallthru
        _
    $region24: #{bottleneck.2} parent=5 // pred_fallthru
      _
    %p190 = scmp.le.s32.totalorder 1, %s10
    %p191 = scmp.lt.s32.totalorder %s10, 19
    %p192 = pnand %p190, %p191
    %p193 = pneg %p192
    // Predicated region
    $region33: #{bottleneck.2} parent=5 // pred_check
      _
    $region34: #{bottleneck.2} parent=5 // pred_check_branch
      %195 = sbr.rel (%p192) target = $region36
    $region35: #{bottleneck.2} parent=5 // pred_region
      %s196 = ssub.s32 %s10, 1
      %s197 = smul.u32 32, %s19
      %p198 = scmp.lt.s32.totalorder %s20, 8
      %s199 = scalar_select %p198, %s20, 8
      %p200 = scmp.lt.s32.totalorder %s197, 63
      %s201 = scalar_select %p200, %s197, 63
      %s202 = smul.addr %s199, 64
      %s203 = sadd.s32 %s201, %s202
      %s204 = smul.addr %s203, 8
      %s205 = scalar_lea.vmem %s0, %s204
      %p206 = pneg %p50
      %p207 = pneg %p47
      %p208 = scmp.lt.s32.totalorder %s20, 8
      %s209 = scalar_select %p208, %s20, 8
      %s210 = smul.addr %s209, 16
      %s211 = smul.addr %s210, 8
      %s212 = scalar_lea.vmem %s1, %s211
      %p213 = pneg %p76
      %p214 = pneg %p73
      %p215 = pneg %p97
      %p216 = pneg %p94
      %p217 = pneg %p118
      %p218 = pneg %p115
      %p219 = pneg %p144
      %p220 = pneg %p141
      %s221 = smul.u32 32, %s19
      %p222 = scmp.lt.s32.totalorder %s221, 63
      %s223 = scalar_select %p222, %s221, 63
      %s224 = smul.addr %s223, 8
      %s225 = scalar_lea.vmem %s4, %s224
      %s226 = smul.u32 32, %s19
      %p227 = scmp.lt.s32.totalorder %s20, 8
      %s228 = scalar_select %p227, %s20, 8
      %p229 = scmp.lt.s32.totalorder %s226, 63
      %s230 = scalar_select %p229, %s226, 63
      %s231 = smul.addr %s228, 64
      %s232 = sadd.s32 %s230, %s231
      %s233 = smul.addr %s232, 8
      %s234 = scalar_lea.vmem %s0, %s233
      %s235 = smul.u32 32, %s19
      %p236 = scmp.lt.s32.totalorder %s20, 8
      %s237 = scalar_select %p236, %s20, 8
      %s238 = smul.addr %s237, 16
      %s239 = smul.addr %s238, 8
      %s240 = scalar_lea.vmem %s1, %s239
      %s241 = smul.u32 32, %s19
      %p242 = scmp.lt.s32.totalorder %s241, 63
      %s243 = scalar_select %p242, %s241, 63
      %s244 = smul.addr %s243, 8
      %s245 = scalar_lea.vmem %s4, %s244
      %s246 = smul.u32 32, %s19
      %p247 = scmp.eq.s32.totalorder %s20, 0
      // Predicated region
      $region37: #{bottleneck.2} parent=35 // pred_check
        %p248 = pneg %p247
      $region38: #{bottleneck.2} parent=35 // pred_check_branch
        %250 = sbr.rel (%p248) target = $region40
      $region39: #{bottleneck.2} parent=35 // pred_region
        %251 = vst [vmem:[#allocation2] sm:$0xff] 0.0
        %252 = vst [vmem:[#allocation2 + $0x8] sm:$0xff] 0.0
        %253 = vst [vmem:[#allocation2 + $0x10] sm:$0xff] 0.0
        %254 = vst [vmem:[#allocation2 + $0x18] sm:$0xff] 0.0
        %255 = vst [vmem:[#allocation2 + $0x20] sm:$0xff] 0.0
        %256 = vst [vmem:[#allocation2 + $0x28] sm:$0xff] 0.0
        %257 = vst [vmem:[#allocation2 + $0x30] sm:$0xff] 0.0
        %258 = vst [vmem:[#allocation2 + $0x38] sm:$0xff] 0.0
        %259 = vst [vmem:[#allocation2 + $0x40] sm:$0xff] 0.0
        %260 = vst [vmem:[#allocation2 + $0x48] sm:$0xff] 0.0
        %261 = vst [vmem:[#allocation2 + $0x50] sm:$0xff] 0.0
        %262 = vst [vmem:[#allocation2 + $0x58] sm:$0xff] 0.0
        %263 = vst [vmem:[#allocation2 + $0x60] sm:$0xff] 0.0
        %264 = vst [vmem:[#allocation2 + $0x68] sm:$0xff] 0.0
        %265 = vst [vmem:[#allocation2 + $0x70] sm:$0xff] 0.0
        %266 = vst [vmem:[#allocation2 + $0x78] sm:$0xff] 0.0
        %267 = vst [vmem:[#allocation2 + $0x80] sm:$0xff] 0.0
        %268 = vst [vmem:[#allocation2 + $0x88] sm:$0xff] 0.0
        %269 = vst [vmem:[#allocation2 + $0x90] sm:$0xff] 0.0
        %270 = vst [vmem:[#allocation2 + $0x98] sm:$0xff] 0.0
        %271 = vst [vmem:[#allocation2 + $0xa0] sm:$0xff] 0.0
        %272 = vst [vmem:[#allocation2 + $0xa8] sm:$0xff] 0.0
        %273 = vst [vmem:[#allocation2 + $0xb0] sm:$0xff] 0.0
        %274 = vst [vmem:[#allocation2 + $0xb8] sm:$0xff] 0.0
        %275 = vst [vmem:[#allocation2 + $0xc0] sm:$0xff] 0.0
        %276 = vst [vmem:[#allocation2 + $0xc8] sm:$0xff] 0.0
        %277 = vst [vmem:[#allocation2 + $0xd0] sm:$0xff] 0.0
        %278 = vst [vmem:[#allocation2 + $0xd8] sm:$0xff] 0.0
        %279 = vst [vmem:[#allocation2 + $0xe0] sm:$0xff] 0.0
        %280 = vst [vmem:[#allocation2 + $0xe8] sm:$0xff] 0.0
        %281 = vst [vmem:[#allocation2 + $0xf0] sm:$0xff] 0.0
        %282 = vst [vmem:[#allocation2 + $0xf8] sm:$0xff] 0.0
      $region40: #{bottleneck.2} parent=35 // pred_fallthru
        _
      %v283 = vld [vmem:[#allocation2] sm:$0xff]
      %v284 = vld [vmem:[#allocation2 + $0x8] sm:$0xff]
      %v285 = vld [vmem:[#allocation2 + $0x10] sm:$0xff]
      %v286 = vld [vmem:[#allocation2 + $0x18] sm:$0xff]
      %v287 = vld [vmem:[#allocation2 + $0x20] sm:$0xff]
      %v288 = vld [vmem:[#allocation2 + $0x28] sm:$0xff]
      %v289 = vld [vmem:[#allocation2 + $0x30] sm:$0xff]
      %v290 = vld [vmem:[#allocation2 + $0x38] sm:$0xff]
      %v291 = vld [vmem:[#allocation2 + $0x40] sm:$0xff]
      %v292 = vld [vmem:[#allocation2 + $0x48] sm:$0xff]
      %v293 = vld [vmem:[#allocation2 + $0x50] sm:$0xff]
      %v294 = vld [vmem:[#allocation2 + $0x58] sm:$0xff]
      %v295 = vld [vmem:[#allocation2 + $0x60] sm:$0xff]
      %v296 = vld [vmem:[#allocation2 + $0x68] sm:$0xff]
      %v297 = vld [vmem:[#allocation2 + $0x70] sm:$0xff]
      %v298 = vld [vmem:[#allocation2 + $0x78] sm:$0xff]
      %v299 = vld [vmem:[#allocation2 + $0x80] sm:$0xff]
      %v300 = vld [vmem:[#allocation2 + $0x88] sm:$0xff]
      %v301 = vld [vmem:[#allocation2 + $0x90] sm:$0xff]
      %v302 = vld [vmem:[#allocation2 + $0x98] sm:$0xff]
      %v303 = vld [vmem:[#allocation2 + $0xa0] sm:$0xff]
      %v304 = vld [vmem:[#allocation2 + $0xa8] sm:$0xff]
      %v305 = vld [vmem:[#allocation2 + $0xb0] sm:$0xff]
      %v306 = vld [vmem:[#allocation2 + $0xb8] sm:$0xff]
      %v307 = vld [vmem:[#allocation2 + $0xc0] sm:$0xff]
      %v308 = vld [vmem:[#allocation2 + $0xc8] sm:$0xff]
      %v309 = vld [vmem:[#allocation2 + $0xd0] sm:$0xff]
      %v310 = vld [vmem:[#allocation2 + $0xd8] sm:$0xff]
      %v311 = vld [vmem:[#allocation2 + $0xe0] sm:$0xff]
      %v312 = vld [vmem:[#allocation2 + $0xe8] sm:$0xff]
      %v313 = vld [vmem:[#allocation2 + $0xf0] sm:$0xff]
      %v314 = vld [vmem:[#allocation2 + $0xf8] sm:$0xff]
      %v315 = vld [vmem:[%s234] sm:$0xff]
      %v316 = vld [vmem:[%s234 + $0x8] sm:$0xff]
      %v317 = vld [vmem:[%s234 + $0x10] sm:$0xff]
      %v318 = vld [vmem:[%s234 + $0x18] sm:$0xff]
      %v319 = vld [vmem:[%s234 + $0x20] sm:$0xff]
      %v320 = vld [vmem:[%s234 + $0x28] sm:$0xff]
      %v321 = vld [vmem:[%s234 + $0x30] sm:$0xff]
      %v322 = vld [vmem:[%s234 + $0x38] sm:$0xff]
      %v323 = vld [vmem:[%s234 + $0x40] sm:$0xff]
      %v324 = vld [vmem:[%s234 + $0x48] sm:$0xff]
      %v325 = vld [vmem:[%s234 + $0x50] sm:$0xff]
      %v326 = vld [vmem:[%s234 + $0x58] sm:$0xff]
      %v327 = vld [vmem:[%s234 + $0x60] sm:$0xff]
      %v328 = vld [vmem:[%s234 + $0x68] sm:$0xff]
      %v329 = vld [vmem:[%s234 + $0x70] sm:$0xff]
      %v330 = vld [vmem:[%s234 + $0x78] sm:$0xff]
      %v331 = vld [vmem:[%s234 + $0x80] sm:$0xff]
      %v332 = vld [vmem:[%s234 + $0x88] sm:$0xff]
      %v333 = vld [vmem:[%s234 + $0x90] sm:$0xff]
      %v334 = vld [vmem:[%s234 + $0x98] sm:$0xff]
      %v335 = vld [vmem:[%s234 + $0xa0] sm:$0xff]
      %v336 = vld [vmem:[%s234 + $0xa8] sm:$0xff]
      %v337 = vld [vmem:[%s234 + $0xb0] sm:$0xff]
      %v338 = vld [vmem:[%s234 + $0xb8] sm:$0xff]
      %v339 = vld [vmem:[%s234 + $0xc0] sm:$0xff]
      %v340 = vld [vmem:[%s234 + $0xc8] sm:$0xff]
      %v341 = vld [vmem:[%s234 + $0xd0] sm:$0xff]
      %v342 = vld [vmem:[%s234 + $0xd8] sm:$0xff]
      %v343 = vld [vmem:[%s234 + $0xe0] sm:$0xff]
      %v344 = vld [vmem:[%s234 + $0xe8] sm:$0xff]
      %v345 = vld [vmem:[%s234 + $0xf0] sm:$0xff]
      %v346 = vld [vmem:[%s234 + $0xf8] sm:$0xff]
      %v347 = vld [vmem:[%s240] sm:$0xff]
      %v348 = vld [vmem:[%s240 + $0x8] sm:$0xff]
      %v349 = vld [vmem:[%s240 + $0x10] sm:$0xff]
      %v350 = vld [vmem:[%s240 + $0x18] sm:$0xff]
      %v351 = vld [vmem:[%s240 + $0x20] sm:$0xff]
      %v352 = vld [vmem:[%s240 + $0x28] sm:$0xff]
      %v353 = vld [vmem:[%s240 + $0x30] sm:$0xff]
      %v354 = vld [vmem:[%s240 + $0x38] sm:$0xff]
      %v355 = vld [vmem:[%s240 + $0x40] sm:$0xff]
      %v356 = vld [vmem:[%s240 + $0x48] sm:$0xff]
      %v357 = vld [vmem:[%s240 + $0x50] sm:$0xff]
      %v358 = vld [vmem:[%s240 + $0x58] sm:$0xff]
      %v359 = vld [vmem:[%s240 + $0x60] sm:$0xff]
      %v360 = vld [vmem:[%s240 + $0x68] sm:$0xff]
      %v361 = vld [vmem:[%s240 + $0x70] sm:$0xff]
      %v362 = vld [vmem:[%s240 + $0x78] sm:$0xff]
      %363 = vmatprep.subr.mxu0 0.0
      %364 = vmatpush1.msra.mxu0 %v347
      %365 = vmatprep.subr.mxu0 0.0
      %366 = vmatpush1.msra.mxu0 %v348
      %367 = vmatprep.subr.mxu0 0.0
      %368 = vmatpush1.msra.mxu0 %v349
      %369 = vmatprep.subr.mxu0 0.0
      %370 = vmatpush1.msra.mxu0 %v350
      %371 = vmatprep.subr.mxu0 0.0
      %372 = vmatpush1.msra.mxu0 %v351
      %373 = vmatprep.subr.mxu0 0.0
      %374 = vmatpush1.msra.mxu0 %v352
      %375 = vmatprep.subr.mxu0 0.0
      %376 = vmatpush1.msra.mxu0 %v353
      %377 = vmatprep.subr.mxu0 0.0
      %378 = vmatpush1.msra.mxu0 %v354
      %379 = vmatprep.subr.mxu0 0.0
      %380 = vmatpush1.msra.mxu0 %v355
      %381 = vmatprep.subr.mxu0 0.0
      %382 = vmatpush1.msra.mxu0 %v356
      %383 = vmatprep.subr.mxu0 0.0
      %384 = vmatpush1.msra.mxu0 %v357
      %385 = vmatprep.subr.mxu0 0.0
      %386 = vmatpush1.msra.mxu0 %v358
      %387 = vmatprep.subr.mxu0 0.0
      %388 = vmatpush1.msra.mxu0 %v359
      %389 = vmatprep.subr.mxu0 0.0
      %390 = vmatpush1.msra.mxu0 %v360
      %391 = vmatprep.subr.mxu0 0.0
      %392 = vmatpush1.msra.mxu0 %v361
      %393 = vmatprep.subr.mxu0 0.0
      %394 = vmatpush1.msra.mxu0 %v362
      %395 = vmatprep.subr.mxu0 0.0
      %396 = vmatpush1.msra.mxu0 0.0
      %397 = vmatprep.subr.mxu0 0.0
      %398 = vmatpush1.msra.mxu0 0.0
      %399 = vmatprep.subr.mxu0 0.0
      %400 = vmatpush1.msra.mxu0 0.0
      %401 = vmatprep.subr.mxu0 0.0
      %402 = vmatpush1.msra.mxu0 0.0
      %403 = vmatprep.subr.mxu0 0.0
      %404 = vmatpush1.msra.mxu0 0.0
      %405 = vmatprep.subr.mxu0 0.0
      %406 = vmatpush1.msra.mxu0 0.0
      %407 = vmatprep.subr.mxu0 0.0
      %408 = vmatpush1.msra.mxu0 0.0
      %409 = vmatprep.subr.mxu0 0.0
      %410 = vmatpush1.msra.mxu0 0.0
      %411 = vmatprep.subr.mxu0 0.0
      %412 = vmatpush1.msra.mxu0 0.0
      %413 = vmatprep.subr.mxu0 0.0
      %414 = vmatpush1.msra.mxu0 0.0
      %415 = vmatprep.subr.mxu0 0.0
      %416 = vmatpush1.msra.mxu0 0.0
      %417 = vmatprep.subr.mxu0 0.0
      %418 = vmatpush1.msra.mxu0 0.0
      %419 = vmatprep.subr.mxu0 0.0
      %420 = vmatpush1.msra.mxu0 0.0
      %421 = vmatprep.subr.mxu0 0.0
      %422 = vmatpush1.msra.mxu0 0.0
      %423 = vmatprep.subr.mxu0 0.0
      %424 = vmatpush1.msra.mxu0 0.0
      %425 = vmatprep.subr.mxu0 0.0
      %426 = vmatpush1.msra.mxu0 0.0
      %427 = vmatprep.mubr.f32.mxu0 0.0
      %428 = vmatmul.mubr.f32.gmra.mrb[0].mxu0 %v315
      %v429 = vpop.f32.mrb[0].mxu0
      %v430 = vadd.f32 0.0, %v429
      %v431 = vpop.f32.mrb[0].mxu0
      %432 = vmatprep.mubr.f32.mxu0 0.0
      %433 = vmatmul.mubr.f32.gmra.mrb[0].mxu0 %v316
      %v434 = vpop.f32.mrb[0].mxu0
      %v435 = vadd.f32 0.0, %v434
      %v436 = vpop.f32.mrb[0].mxu0
      %437 = vmatprep.mubr.f32.mxu0 0.0
      %438 = vmatmul.mubr.f32.gmra.mrb[0].mxu0 %v317
      %v439 = vpop.f32.mrb[0].mxu0
      %v440 = vadd.f32 0.0, %v439
      %v441 = vpop.f32.mrb[0].mxu0
      %442 = vmatprep.mubr.f32.mxu0 0.0
      %443 = vmatmul.mubr.f32.gmra.mrb[0].mxu0 %v318
      %v444 = vpop.f32.mrb[0].mxu0
      %v445 = vadd.f32 0.0, %v444
      %v446 = vpop.f32.mrb[0].mxu0
      %447 = vmatprep.mubr.f32.mxu0 0.0
      %448 = vmatmul.mubr.f32.gmra.mrb[0].mxu0 %v319
      %v449 = vpop.f32.mrb[0].mxu0
      %v450 = vadd.f32 0.0, %v449
      %v451 = vpop.f32.mrb[0].mxu0
      %452 = vmatprep.mubr.f32.mxu0 0.0
      %453 = vmatmul.mubr.f32.gmra.mrb[0].mxu0 %v320
      %v454 = vpop.f32.mrb[0].mxu0
      %v455 = vadd.f32 0.0, %v454
      %v456 = vpop.f32.mrb[0].mxu0
      %457 = vmatprep.mubr.f32.mxu0 0.0
      %458 = vmatmul.mubr.f32.gmra.mrb[0].mxu0 %v321
      %v459 = vpop.f32.mrb[0].mxu0
      %v460 = vadd.f32 0.0, %v459
      %v461 = vpop.f32.mrb[0].mxu0
      %462 = vmatprep.mubr.f32.mxu0 0.0
      %463 = vmatmul.mubr.f32.gmra.mrb[0].mxu0 %v322
      %v464 = vpop.f32.mrb[0].mxu0
      %v465 = vadd.f32 0.0, %v464
      %v466 = vpop.f32.mrb[0].mxu0
      %467 = vmatprep.mubr.f32.mxu0 0.0
      %468 = vmatmul.mubr.f32.gmra.mrb[0].mxu0 %v323
      %v469 = vpop.f32.mrb[0].mxu0
      %v470 = vadd.f32 0.0, %v469
      %v471 = vpop.f32.mrb[0].mxu0
      %472 = vmatprep.mubr.f32.mxu0 0.0
      %473 = vmatmul.mubr.f32.gmra.mrb[0].mxu0 %v324
      %v474 = vpop.f32.mrb[0].mxu0
      %v475 = vadd.f32 0.0, %v474
      %v476 = vpop.f32.mrb[0].mxu0
      %477 = vmatprep.mubr.f32.mxu0 0.0
      %478 = vmatmul.mubr.f32.gmra.mrb[0].mxu0 %v325
      %v479 = vpop.f32.mrb[0].mxu0
      %v480 = vadd.f32 0.0, %v479
      %v481 = vpop.f32.mrb[0].mxu0
      %482 = vmatprep.mubr.f32.mxu0 0.0
      %483 = vmatmul.mubr.f32.gmra.mrb[0].mxu0 %v326
      %v484 = vpop.f32.mrb[0].mxu0
      %v485 = vadd.f32 0.0, %v484
      %v486 = vpop.f32.mrb[0].mxu0
      %487 = vmatprep.mubr.f32.mxu0 0.0
      %488 = vmatmul.mubr.f32.gmra.mrb[0].mxu0 %v327
      %v489 = vpop.f32.mrb[0].mxu0
      %v490 = vadd.f32 0.0, %v489
      %v491 = vpop.f32.mrb[0].mxu0
      %492 = vmatprep.mubr.f32.mxu0 0.0
      %493 = vmatmul.mubr.f32.gmra.mrb[0].mxu0 %v328
      %v494 = vpop.f32.mrb[0].mxu0
      %v495 = vadd.f32 0.0, %v494
      %v496 = vpop.f32.mrb[0].mxu0
      %497 = vmatprep.mubr.f32.mxu0 0.0
      %498 = vmatmul.mubr.f32.gmra.mrb[0].mxu0 %v329
      %v499 = vpop.f32.mrb[0].mxu0
      %v500 = vadd.f32 0.0, %v499
      %v501 = vpop.f32.mrb[0].mxu0
      %502 = vmatprep.mubr.f32.mxu0 0.0
      %503 = vmatmul.mubr.f32.gmra.mrb[0].mxu0 %v330
      %v504 = vpop.f32.mrb[0].mxu0
      %v505 = vadd.f32 0.0, %v504
      %v506 = vpop.f32.mrb[0].mxu0
      %507 = vmatprep.mubr.f32.mxu0 0.0
      %508 = vmatmul.mubr.f32.gmra.mrb[0].mxu0 %v331
      %v509 = vpop.f32.mrb[0].mxu0
      %v510 = vadd.f32 0.0, %v509
      %v511 = vpop.f32.mrb[0].mxu0
      %512 = vmatprep.mubr.f32.mxu0 0.0
      %513 = vmatmul.mubr.f32.gmra.mrb[0].mxu0 %v332
      %v514 = vpop.f32.mrb[0].mxu0
      %v515 = vadd.f32 0.0, %v514
      %v516 = vpop.f32.mrb[0].mxu0
      %517 = vmatprep.mubr.f32.mxu0 0.0
      %518 = vmatmul.mubr.f32.gmra.mrb[0].mxu0 %v333
      %v519 = vpop.f32.mrb[0].mxu0
      %v520 = vadd.f32 0.0, %v519
      %v521 = vpop.f32.mrb[0].mxu0
      %522 = vmatprep.mubr.f32.mxu0 0.0
      %523 = vmatmul.mubr.f32.gmra.mrb[0].mxu0 %v334
      %v524 = vpop.f32.mrb[0].mxu0
      %v525 = vadd.f32 0.0, %v524
      %v526 = vpop.f32.mrb[0].mxu0
      %527 = vmatprep.mubr.f32.mxu0 0.0
      %528 = vmatmul.mubr.f32.gmra.mrb[0].mxu0 %v335
      %v529 = vpop.f32.mrb[0].mxu0
      %v530 = vadd.f32 0.0, %v529
      %v531 = vpop.f32.mrb[0].mxu0
      %532 = vmatprep.mubr.f32.mxu0 0.0
      %533 = vmatmul.mubr.f32.gmra.mrb[0].mxu0 %v336
      %v534 = vpop.f32.mrb[0].mxu0
      %v535 = vadd.f32 0.0, %v534
      %v536 = vpop.f32.mrb[0].mxu0
      %537 = vmatprep.mubr.f32.mxu0 0.0
      %538 = vmatmul.mubr.f32.gmra.mrb[0].mxu0 %v337
      %v539 = vpop.f32.mrb[0].mxu0
      %v540 = vadd.f32 0.0, %v539
      %v541 = vpop.f32.mrb[0].mxu0
      %542 = vmatprep.mubr.f32.mxu0 0.0
      %543 = vmatmul.mubr.f32.gmra.mrb[0].mxu0 %v338
      %v544 = vpop.f32.mrb[0].mxu0
      %v545 = vadd.f32 0.0, %v544
      %v546 = vpop.f32.mrb[0].mxu0
      %547 = vmatprep.mubr.f32.mxu0 0.0
      %548 = vmatmul.mubr.f32.gmra.mrb[0].mxu0 %v339
      %v549 = vpop.f32.mrb[0].mxu0
      %v550 = vadd.f32 0.0, %v549
      %v551 = vpop.f32.mrb[0].mxu0
      %552 = vmatprep.mubr.f32.mxu0 0.0
      %553 = vmatmul.mubr.f32.gmra.mrb[0].mxu0 %v340
      %v554 = vpop.f32.mrb[0].mxu0
      %v555 = vadd.f32 0.0, %v554
      %v556 = vpop.f32.mrb[0].mxu0
      %557 = vmatprep.mubr.f32.mxu0 0.0
      %558 = vmatmul.mubr.f32.gmra.mrb[0].mxu0 %v341
      %v559 = vpop.f32.mrb[0].mxu0
      %v560 = vadd.f32 0.0, %v559
      %v561 = vpop.f32.mrb[0].mxu0
      %562 = vmatprep.mubr.f32.mxu0 0.0
      %563 = vmatmul.mubr.f32.gmra.mrb[0].mxu0 %v342
      %v564 = vpop.f32.mrb[0].mxu0
      %v565 = vadd.f32 0.0, %v564
      %v566 = vpop.f32.mrb[0].mxu0
      %567 = vmatprep.mubr.f32.mxu0 0.0
      %568 = vmatmul.mubr.f32.gmra.mrb[0].mxu0 %v343
      %v569 = vpop.f32.mrb[0].mxu0
      %v570 = vadd.f32 0.0, %v569
      %v571 = vpop.f32.mrb[0].mxu0
      %572 = vmatprep.mubr.f32.mxu0 0.0
      %573 = vmatmul.mubr.f32.gmra.mrb[0].mxu0 %v344
      %v574 = vpop.f32.mrb[0].mxu0
      %v575 = vadd.f32 0.0, %v574
      %v576 = vpop.f32.mrb[0].mxu0
      %577 = vmatprep.mubr.f32.mxu0 0.0
      %578 = vmatmul.mubr.f32.gmra.mrb[0].mxu0 %v345
      %v579 = vpop.f32.mrb[0].mxu0
      %v580 = vadd.f32 0.0, %v579
      %v581 = vpop.f32.mrb[0].mxu0
      %582 = vmatprep.mubr.f32.mxu0 0.0
      %583 = vmatmul.mubr.f32.gmra.mrb[0].mxu0 %v346
      %v584 = vpop.f32.mrb[0].mxu0
      %v585 = vadd.f32 0.0, %v584
      %v586 = vpop.f32.mrb[0].mxu0
      %587 = vdwg.mxu0
      %v588 = vadd.f32 %v283, %v430
      %v589 = vadd.f32 %v284, %v435
      %v590 = vadd.f32 %v285, %v440
      %v591 = vadd.f32 %v286, %v445
      %v592 = vadd.f32 %v287, %v450
      %v593 = vadd.f32 %v288, %v455
      %v594 = vadd.f32 %v289, %v460
      %v595 = vadd.f32 %v290, %v465
      %v596 = vadd.f32 %v291, %v470
      %v597 = vadd.f32 %v292, %v475
      %v598 = vadd.f32 %v293, %v480
      %v599 = vadd.f32 %v294, %v485
      %v600 = vadd.f32 %v295, %v490
      %v601 = vadd.f32 %v296, %v495
      %v602 = vadd.f32 %v297, %v500
      %v603 = vadd.f32 %v298, %v505
      %v604 = vadd.f32 %v299, %v510
      %v605 = vadd.f32 %v300, %v515
      %v606 = vadd.f32 %v301, %v520
      %v607 = vadd.f32 %v302, %v525
      %v608 = vadd.f32 %v303, %v530
      %v609 = vadd.f32 %v304, %v535
      %v610 = vadd.f32 %v305, %v540
      %v611 = vadd.f32 %v306, %v545
      %v612 = vadd.f32 %v307, %v550
      %v613 = vadd.f32 %v308, %v555
      %v614 = vadd.f32 %v309, %v560
      %v615 = vadd.f32 %v310, %v565
      %v616 = vadd.f32 %v311, %v570
      %v617 = vadd.f32 %v312, %v575
      %v618 = vadd.f32 %v313, %v580
      %v619 = vadd.f32 %v314, %v585
      %620 = vst [vmem:[#allocation2] sm:$0xff] %v588
      %621 = vst [vmem:[#allocation2 + $0x8] sm:$0xff] %v589
      %622 = vst [vmem:[#allocation2 + $0x10] sm:$0xff] %v590
      %623 = vst [vmem:[#allocation2 + $0x18] sm:$0xff] %v591
      %624 = vst [vmem:[#allocation2 + $0x20] sm:$0xff] %v592
      %625 = vst [vmem:[#allocation2 + $0x28] sm:$0xff] %v593
      %626 = vst [vmem:[#allocation2 + $0x30] sm:$0xff] %v594
      %627 = vst [vmem:[#allocation2 + $0x38] sm:$0xff] %v595
      %628 = vst [vmem:[#allocation2 + $0x40] sm:$0xff] %v596
      %629 = vst [vmem:[#allocation2 + $0x48] sm:$0xff] %v597
      %630 = vst [vmem:[#allocation2 + $0x50] sm:$0xff] %v598
      %631 = vst [vmem:[#allocation2 + $0x58] sm:$0xff] %v599
      %632 = vst [vmem:[#allocation2 + $0x60] sm:$0xff] %v600
      %633 = vst [vmem:[#allocation2 + $0x68] sm:$0xff] %v601
      %634 = vst [vmem:[#allocation2 + $0x70] sm:$0xff] %v602
      %635 = vst [vmem:[#allocation2 + $0x78] sm:$0xff] %v603
      %636 = vst [vmem:[#allocation2 + $0x80] sm:$0xff] %v604
      %637 = vst [vmem:[#allocation2 + $0x88] sm:$0xff] %v605
      %638 = vst [vmem:[#allocation2 + $0x90] sm:$0xff] %v606
      %639 = vst [vmem:[#allocation2 + $0x98] sm:$0xff] %v607
      %640 = vst [vmem:[#allocation2 + $0xa0] sm:$0xff] %v608
      %641 = vst [vmem:[#allocation2 + $0xa8] sm:$0xff] %v609
      %642 = vst [vmem:[#allocation2 + $0xb0] sm:$0xff] %v610
      %643 = vst [vmem:[#allocation2 + $0xb8] sm:$0xff] %v611
      %644 = vst [vmem:[#allocation2 + $0xc0] sm:$0xff] %v612
      %645 = vst [vmem:[#allocation2 + $0xc8] sm:$0xff] %v613
      %646 = vst [vmem:[#allocation2 + $0xd0] sm:$0xff] %v614
      %647 = vst [vmem:[#allocation2 + $0xd8] sm:$0xff] %v615
      %648 = vst [vmem:[#allocation2 + $0xe0] sm:$0xff] %v616
      %649 = vst [vmem:[#allocation2 + $0xe8] sm:$0xff] %v617
      %650 = vst [vmem:[#allocation2 + $0xf0] sm:$0xff] %v618
      %651 = vst [vmem:[#allocation2 + $0xf8] sm:$0xff] %v619
      %p652 = scmp.eq.s32.totalorder %s20, 8
      // Predicated region
      $region41: #{bottleneck.2} parent=35 // pred_check
        %p653 = pneg %p652
      $region42: #{bottleneck.2} parent=35 // pred_check_branch
        %655 = sbr.rel (%p653) target = $region44
      $region43: #{bottleneck.2} parent=35 // pred_region
        %v656 = vld [vmem:[#allocation2] sm:$0xff]
        %v657 = vld [vmem:[#allocation2 + $0x8] sm:$0xff]
        %v658 = vld [vmem:[#allocation2 + $0x10] sm:$0xff]
        %v659 = vld [vmem:[#allocation2 + $0x18] sm:$0xff]
        %v660 = vld [vmem:[#allocation2 + $0x20] sm:$0xff]
        %v661 = vld [vmem:[#allocation2 + $0x28] sm:$0xff]
        %v662 = vld [vmem:[#allocation2 + $0x30] sm:$0xff]
        %v663 = vld [vmem:[#allocation2 + $0x38] sm:$0xff]
        %v664 = vld [vmem:[#allocation2 + $0x40] sm:$0xff]
        %v665 = vld [vmem:[#allocation2 + $0x48] sm:$0xff]
        %v666 = vld [vmem:[#allocation2 + $0x50] sm:$0xff]
        %v667 = vld [vmem:[#allocation2 + $0x58] sm:$0xff]
        %v668 = vld [vmem:[#allocation2 + $0x60] sm:$0xff]
        %v669 = vld [vmem:[#allocation2 + $0x68] sm:$0xff]
        %v670 = vld [vmem:[#allocation2 + $0x70] sm:$0xff]
        %v671 = vld [vmem:[#allocation2 + $0x78] sm:$0xff]
        %v672 = vld [vmem:[#allocation2 + $0x80] sm:$0xff]
        %v673 = vld [vmem:[#allocation2 + $0x88] sm:$0xff]
        %v674 = vld [vmem:[#allocation2 + $0x90] sm:$0xff]
        %v675 = vld [vmem:[#allocation2 + $0x98] sm:$0xff]
        %v676 = vld [vmem:[#allocation2 + $0xa0] sm:$0xff]
        %v677 = vld [vmem:[#allocation2 + $0xa8] sm:$0xff]
        %v678 = vld [vmem:[#allocation2 + $0xb0] sm:$0xff]
        %v679 = vld [vmem:[#allocation2 + $0xb8] sm:$0xff]
        %v680 = vld [vmem:[#allocation2 + $0xc0] sm:$0xff]
        %v681 = vld [vmem:[#allocation2 + $0xc8] sm:$0xff]
        %v682 = vld [vmem:[#allocation2 + $0xd0] sm:$0xff]
        %v683 = vld [vmem:[#allocation2 + $0xd8] sm:$0xff]
        %v684 = vld [vmem:[#allocation2 + $0xe0] sm:$0xff]
        %v685 = vld [vmem:[#allocation2 + $0xe8] sm:$0xff]
        %v686 = vld [vmem:[#allocation2 + $0xf0] sm:$0xff]
        %v687 = vld [vmem:[#allocation2 + $0xf8] sm:$0xff]
        %v688 = vld [vmem:[%s2] sm:$0x1]
        %v690 = vlaneseq
        %v691 = vshrl.u32 %v690, 7
        %v692 = vsub.s32 0, %v691
        %v693 = vrot.slane %v688, %v692
        %v695 = vmul.f32 %v656, %v693
        %v696 = vmul.f32 %v657, %v693
        %v697 = vmul.f32 %v658, %v693
        %v698 = vmul.f32 %v659, %v693
        %v699 = vmul.f32 %v660, %v693
        %v700 = vmul.f32 %v661, %v693
        %v701 = vmul.f32 %v662, %v693
        %v702 = vmul.f32 %v663, %v693
        %v703 = vmul.f32 %v664, %v693
        %v704 = vmul.f32 %v665, %v693
        %v705 = vmul.f32 %v666, %v693
        %v706 = vmul.f32 %v667, %v693
        %v707 = vmul.f32 %v668, %v693
        %v708 = vmul.f32 %v669, %v693
        %v709 = vmul.f32 %v670, %v693
        %v710 = vmul.f32 %v671, %v693
        %v711 = vmul.f32 %v672, %v693
        %v712 = vmul.f32 %v673, %v693
        %v713 = vmul.f32 %v674, %v693
        %v714 = vmul.f32 %v675, %v693
        %v715 = vmul.f32 %v676, %v693
        %v716 = vmul.f32 %v677, %v693
        %v717 = vmul.f32 %v678, %v693
        %v718 = vmul.f32 %v679, %v693
        %v719 = vmul.f32 %v680, %v693
        %v720 = vmul.f32 %v681, %v693
        %v721 = vmul.f32 %v682, %v693
        %v722 = vmul.f32 %v683, %v693
        %v723 = vmul.f32 %v684, %v693
        %v724 = vmul.f32 %v685, %v693
        %v725 = vmul.f32 %v686, %v693
        %v726 = vmul.f32 %v687, %v693
        %v727 = vld [vmem:[%s3] sm:$0x1]
        %v729 = vlaneseq
        %v730 = vshrl.u32 %v729, 7
        %v731 = vsub.s32 0, %v730
        %v732 = vrot.slane %v727, %v731
        %v734 = vadd.f32 %v695, %v732
        %v735 = vadd.f32 %v696, %v732
        %v736 = vadd.f32 %v697, %v732
        %v737 = vadd.f32 %v698, %v732
        %v738 = vadd.f32 %v699, %v732
        %v739 = vadd.f32 %v700, %v732
        %v740 = vadd.f32 %v701, %v732
        %v741 = vadd.f32 %v702, %v732
        %v742 = vadd.f32 %v703, %v732
        %v743 = vadd.f32 %v704, %v732
        %v744 = vadd.f32 %v705, %v732
        %v745 = vadd.f32 %v706, %v732
        %v746 = vadd.f32 %v707, %v732
        %v747 = vadd.f32 %v708, %v732
        %v748 = vadd.f32 %v709, %v732
        %v749 = vadd.f32 %v710, %v732
        %v750 = vadd.f32 %v711, %v732
        %v751 = vadd.f32 %v712, %v732
        %v752 = vadd.f32 %v713, %v732
        %v753 = vadd.f32 %v714, %v732
        %v754 = vadd.f32 %v715, %v732
        %v755 = vadd.f32 %v716, %v732
        %v756 = vadd.f32 %v717, %v732
        %v757 = vadd.f32 %v718, %v732
        %v758 = vadd.f32 %v719, %v732
        %v759 = vadd.f32 %v720, %v732
        %v760 = vadd.f32 %v721, %v732
        %v761 = vadd.f32 %v722, %v732
        %v762 = vadd.f32 %v723, %v732
        %v763 = vadd.f32 %v724, %v732
        %v764 = vadd.f32 %v725, %v732
        %v765 = vadd.f32 %v726, %v732
        %v766 = vsub.f32 0.0, %v734
        %v767 = vsub.f32 0.0, %v735
        %v768 = vsub.f32 0.0, %v736
        %v769 = vsub.f32 0.0, %v737
        %v770 = vsub.f32 0.0, %v738
        %v771 = vsub.f32 0.0, %v739
        %v772 = vsub.f32 0.0, %v740
        %v773 = vsub.f32 0.0, %v741
        %v774 = vsub.f32 0.0, %v742
        %v775 = vsub.f32 0.0, %v743
        %v776 = vsub.f32 0.0, %v744
        %v777 = vsub.f32 0.0, %v745
        %v778 = vsub.f32 0.0, %v746
        %v779 = vsub.f32 0.0, %v747
        %v780 = vsub.f32 0.0, %v748
        %v781 = vsub.f32 0.0, %v749
        %v782 = vsub.f32 0.0, %v750
        %v783 = vsub.f32 0.0, %v751
        %v784 = vsub.f32 0.0, %v752
        %v785 = vsub.f32 0.0, %v753
        %v786 = vsub.f32 0.0, %v754
        %v787 = vsub.f32 0.0, %v755
        %v788 = vsub.f32 0.0, %v756
        %v789 = vsub.f32 0.0, %v757
        %v790 = vsub.f32 0.0, %v758
        %v791 = vsub.f32 0.0, %v759
        %v792 = vsub.f32 0.0, %v760
        %v793 = vsub.f32 0.0, %v761
        %v794 = vsub.f32 0.0, %v762
        %v795 = vsub.f32 0.0, %v763
        %v796 = vsub.f32 0.0, %v764
        %v797 = vsub.f32 0.0, %v765
        %v798 = vmul.f32 %v766, 1.442695
        %v799 = vpow.pop %v798
        %v800 = vmul.f32 %v767, 1.442695
        %v801 = vpow.pop %v800
        %v802 = vmul.f32 %v768, 1.442695
        %v803 = vpow.pop %v802
        %v804 = vmul.f32 %v769, 1.442695
        %v805 = vpow.pop %v804
        %v806 = vmul.f32 %v770, 1.442695
        %v807 = vpow.pop %v806
        %v808 = vmul.f32 %v771, 1.442695
        %v809 = vpow.pop %v808
        %v810 = vmul.f32 %v772, 1.442695
        %v811 = vpow.pop %v810
        %v812 = vmul.f32 %v773, 1.442695
        %v813 = vpow.pop %v812
        %v814 = vmul.f32 %v774, 1.442695
        %v815 = vpow.pop %v814
        %v816 = vmul.f32 %v775, 1.442695
        %v817 = vpow.pop %v816
        %v818 = vmul.f32 %v776, 1.442695
        %v819 = vpow.pop %v818
        %v820 = vmul.f32 %v777, 1.442695
        %v821 = vpow.pop %v820
        %v822 = vmul.f32 %v778, 1.442695
        %v823 = vpow.pop %v822
        %v824 = vmul.f32 %v779, 1.442695
        %v825 = vpow.pop %v824
        %v826 = vmul.f32 %v780, 1.442695
        %v827 = vpow.pop %v826
        %v828 = vmul.f32 %v781, 1.442695
        %v829 = vpow.pop %v828
        %v830 = vmul.f32 %v782, 1.442695
        %v831 = vpow.pop %v830
        %v832 = vmul.f32 %v783, 1.442695
        %v833 = vpow.pop %v832
        %v834 = vmul.f32 %v784, 1.442695
        %v835 = vpow.pop %v834
        %v836 = vmul.f32 %v785, 1.442695
        %v837 = vpow.pop %v836
        %v838 = vmul.f32 %v786, 1.442695
        %v839 = vpow.pop %v838
        %v840 = vmul.f32 %v787, 1.442695
        %v841 = vpow.pop %v840
        %v842 = vmul.f32 %v788, 1.442695
        %v843 = vpow.pop %v842
        %v844 = vmul.f32 %v789, 1.442695
        %v845 = vpow.pop %v844
        %v846 = vmul.f32 %v790, 1.442695
        %v847 = vpow.pop %v846
        %v848 = vmul.f32 %v791, 1.442695
        %v849 = vpow.pop %v848
        %v850 = vmul.f32 %v792, 1.442695
        %v851 = vpow.pop %v850
        %v852 = vmul.f32 %v793, 1.442695
        %v853 = vpow.pop %v852
        %v854 = vmul.f32 %v794, 1.442695
        %v855 = vpow.pop %v854
        %v856 = vmul.f32 %v795, 1.442695
        %v857 = vpow.pop %v856
        %v858 = vmul.f32 %v796, 1.442695
        %v859 = vpow.pop %v858
        %v860 = vmul.f32 %v797, 1.442695
        %v861 = vpow.pop %v860
        %v862 = vadd.f32 %v799, 1.0
        %v863 = vadd.f32 %v801, 1.0
        %v864 = vadd.f32 %v803, 1.0
        %v865 = vadd.f32 %v805, 1.0
        %v866 = vadd.f32 %v807, 1.0
        %v867 = vadd.f32 %v809, 1.0
        %v868 = vadd.f32 %v811, 1.0
        %v869 = vadd.f32 %v813, 1.0
        %v870 = vadd.f32 %v815, 1.0
        %v871 = vadd.f32 %v817, 1.0
        %v872 = vadd.f32 %v819, 1.0
        %v873 = vadd.f32 %v821, 1.0
        %v874 = vadd.f32 %v823, 1.0
        %v875 = vadd.f32 %v825, 1.0
        %v876 = vadd.f32 %v827, 1.0
        %v877 = vadd.f32 %v829, 1.0
        %v878 = vadd.f32 %v831, 1.0
        %v879 = vadd.f32 %v833, 1.0
        %v880 = vadd.f32 %v835, 1.0
        %v881 = vadd.f32 %v837, 1.0
        %v882 = vadd.f32 %v839, 1.0
        %v883 = vadd.f32 %v841, 1.0
        %v884 = vadd.f32 %v843, 1.0
        %v885 = vadd.f32 %v845, 1.0
        %v886 = vadd.f32 %v847, 1.0
        %v887 = vadd.f32 %v849, 1.0
        %v888 = vadd.f32 %v851, 1.0
        %v889 = vadd.f32 %v853, 1.0
        %v890 = vadd.f32 %v855, 1.0
        %v891 = vadd.f32 %v857, 1.0
        %v892 = vadd.f32 %v859, 1.0
        %v893 = vadd.f32 %v861, 1.0
        %v894 = vrcp.pop %v862
        %v895 = vmul.f32 1.0, %v894
        %v896 = vrcp.pop %v863
        %v897 = vmul.f32 1.0, %v896
        %v898 = vrcp.pop %v864
        %v899 = vmul.f32 1.0, %v898
        %v900 = vrcp.pop %v865
        %v901 = vmul.f32 1.0, %v900
        %v902 = vrcp.pop %v866
        %v903 = vmul.f32 1.0, %v902
        %v904 = vrcp.pop %v867
        %v905 = vmul.f32 1.0, %v904
        %v906 = vrcp.pop %v868
        %v907 = vmul.f32 1.0, %v906
        %v908 = vrcp.pop %v869
        %v909 = vmul.f32 1.0, %v908
        %v910 = vrcp.pop %v870
        %v911 = vmul.f32 1.0, %v910
        %v912 = vrcp.pop %v871
        %v913 = vmul.f32 1.0, %v912
        %v914 = vrcp.pop %v872
        %v915 = vmul.f32 1.0, %v914
        %v916 = vrcp.pop %v873
        %v917 = vmul.f32 1.0, %v916
        %v918 = vrcp.pop %v874
        %v919 = vmul.f32 1.0, %v918
        %v920 = vrcp.pop %v875
        %v921 = vmul.f32 1.0, %v920
        %v922 = vrcp.pop %v876
        %v923 = vmul.f32 1.0, %v922
        %v924 = vrcp.pop %v877
        %v925 = vmul.f32 1.0, %v924
        %v926 = vrcp.pop %v878
        %v927 = vmul.f32 1.0, %v926
        %v928 = vrcp.pop %v879
        %v929 = vmul.f32 1.0, %v928
        %v930 = vrcp.pop %v880
        %v931 = vmul.f32 1.0, %v930
        %v932 = vrcp.pop %v881
        %v933 = vmul.f32 1.0, %v932
        %v934 = vrcp.pop %v882
        %v935 = vmul.f32 1.0, %v934
        %v936 = vrcp.pop %v883
        %v937 = vmul.f32 1.0, %v936
        %v938 = vrcp.pop %v884
        %v939 = vmul.f32 1.0, %v938
        %v940 = vrcp.pop %v885
        %v941 = vmul.f32 1.0, %v940
        %v942 = vrcp.pop %v886
        %v943 = vmul.f32 1.0, %v942
        %v944 = vrcp.pop %v887
        %v945 = vmul.f32 1.0, %v944
        %v946 = vrcp.pop %v888
        %v947 = vmul.f32 1.0, %v946
        %v948 = vrcp.pop %v889
        %v949 = vmul.f32 1.0, %v948
        %v950 = vrcp.pop %v890
        %v951 = vmul.f32 1.0, %v950
        %v952 = vrcp.pop %v891
        %v953 = vmul.f32 1.0, %v952
        %v954 = vrcp.pop %v892
        %v955 = vmul.f32 1.0, %v954
        %v956 = vrcp.pop %v893
        %v957 = vmul.f32 1.0, %v956
        %v958 = vmul.f32 %v734, %v895
        %v959 = vmul.f32 %v735, %v897
        %v960 = vmul.f32 %v736, %v899
        %v961 = vmul.f32 %v737, %v901
        %v962 = vmul.f32 %v738, %v903
        %v963 = vmul.f32 %v739, %v905
        %v964 = vmul.f32 %v740, %v907
        %v965 = vmul.f32 %v741, %v909
        %v966 = vmul.f32 %v742, %v911
        %v967 = vmul.f32 %v743, %v913
        %v968 = vmul.f32 %v744, %v915
        %v969 = vmul.f32 %v745, %v917
        %v970 = vmul.f32 %v746, %v919
        %v971 = vmul.f32 %v747, %v921
        %v972 = vmul.f32 %v748, %v923
        %v973 = vmul.f32 %v749, %v925
        %v974 = vmul.f32 %v750, %v927
        %v975 = vmul.f32 %v751, %v929
        %v976 = vmul.f32 %v752, %v931
        %v977 = vmul.f32 %v753, %v933
        %v978 = vmul.f32 %v754, %v935
        %v979 = vmul.f32 %v755, %v937
        %v980 = vmul.f32 %v756, %v939
        %v981 = vmul.f32 %v757, %v941
        %v982 = vmul.f32 %v758, %v943
        %v983 = vmul.f32 %v759, %v945
        %v984 = vmul.f32 %v760, %v947
        %v985 = vmul.f32 %v761, %v949
        %v986 = vmul.f32 %v762, %v951
        %v987 = vmul.f32 %v763, %v953
        %v988 = vmul.f32 %v764, %v955
        %v989 = vmul.f32 %v765, %v957
        %990 = vst [vmem:[%s245] sm:$0xff] %v958
        %991 = vst [vmem:[%s245 + $0x8] sm:$0xff] %v959
        %992 = vst [vmem:[%s245 + $0x10] sm:$0xff] %v960
        %993 = vst [vmem:[%s245 + $0x18] sm:$0xff] %v961
        %994 = vst [vmem:[%s245 + $0x20] sm:$0xff] %v962
        %995 = vst [vmem:[%s245 + $0x28] sm:$0xff] %v963
        %996 = vst [vmem:[%s245 + $0x30] sm:$0xff] %v964
        %997 = vst [vmem:[%s245 + $0x38] sm:$0xff] %v965
        %998 = vst [vmem:[%s245 + $0x40] sm:$0xff] %v966
        %999 = vst [vmem:[%s245 + $0x48] sm:$0xff] %v967
        %1000 = vst [vmem:[%s245 + $0x50] sm:$0xff] %v968
        %1001 = vst [vmem:[%s245 + $0x58] sm:$0xff] %v969
        %1002 = vst [vmem:[%s245 + $0x60] sm:$0xff] %v970
        %1003 = vst [vmem:[%s245 + $0x68] sm:$0xff] %v971
        %1004 = vst [vmem:[%s245 + $0x70] sm:$0xff] %v972
        %1005 = vst [vmem:[%s245 + $0x78] sm:$0xff] %v973
        %1006 = vst [vmem:[%s245 + $0x80] sm:$0xff] %v974
        %1007 = vst [vmem:[%s245 + $0x88] sm:$0xff] %v975
        %1008 = vst [vmem:[%s245 + $0x90] sm:$0xff] %v976
        %1009 = vst [vmem:[%s245 + $0x98] sm:$0xff] %v977
        %1010 = vst [vmem:[%s245 + $0xa0] sm:$0xff] %v978
        %1011 = vst [vmem:[%s245 + $0xa8] sm:$0xff] %v979
        %1012 = vst [vmem:[%s245 + $0xb0] sm:$0xff] %v980
        %1013 = vst [vmem:[%s245 + $0xb8] sm:$0xff] %v981
        %1014 = vst [vmem:[%s245 + $0xc0] sm:$0xff] %v982
        %1015 = vst [vmem:[%s245 + $0xc8] sm:$0xff] %v983
        %1016 = vst [vmem:[%s245 + $0xd0] sm:$0xff] %v984
        %1017 = vst [vmem:[%s245 + $0xd8] sm:$0xff] %v985
        %1018 = vst [vmem:[%s245 + $0xe0] sm:$0xff] %v986
        %1019 = vst [vmem:[%s245 + $0xe8] sm:$0xff] %v987
        %1020 = vst [vmem:[%s245 + $0xf0] sm:$0xff] %v988
        %1021 = vst [vmem:[%s245 + $0xf8] sm:$0xff] %v989
      $region44: #{bottleneck.2} parent=35 // pred_fallthru
        _
      %s1022 = smul.u32 32, %s19
      %p1023 = scmp.lt.s32.totalorder %s1022, 63
      %s1024 = scalar_select %p1023, %s1022, 63
      %s1025 = smul.addr %s1024, 8
      %s1026 = scalar_lea.vmem %s4, %s1025
      // Predicated region
      $region45: #{bottleneck.2} parent=35 // pred_check
        %p1027 = pneg %p141
      $region46: #{bottleneck.2} parent=35 // pred_check_branch
        %1029 = sbr.rel (%p1027) target = $region48
      $region47: #{bottleneck.2} parent=35 // pred_region
        %s1030 = smul.u32 32, %s19
      $region48: #{bottleneck.2} parent=35 // pred_fallthru
        _
    $region36: #{bottleneck.2} parent=5 // pred_fallthru
      _
    %p1031 = scmp.le.s32.totalorder 2, %s10
    // Predicated region
    $region49: #{bottleneck.2} parent=5 // pred_check
      %p1032 = pneg %p1031
    $region50: #{bottleneck.2} parent=5 // pred_check_branch
      %1034 = sbr.rel (%p1032) target = $region52
    $region51: #{bottleneck.2} parent=5 // pred_region
      %s1035 = ssub.s32 %s10, 2
      // Predicated region
      $region53: #{bottleneck.2} parent=51 // pred_check
        %p1036 = pneg %p147
      $region54: #{bottleneck.2} parent=51 // pred_check_branch
        %1038 = sbr.rel (%p1036) target = $region56
      $region55: #{bottleneck.2} parent=51 // pred_region
        %s1039 = smul.u32 32, %s21
        %p1040 = scmp.lt.s32.totalorder %s1039, 63
        %s1041 = scalar_select %p1040, %s1039, 63
        %s1042 = smul.addr %s1041, 8
        %s1043 = scalar_lea.vmem %s4, %s1042
      $region56: #{bottleneck.2} parent=51 // pred_fallthru
        _
    $region52: #{bottleneck.2} parent=5 // pred_fallthru
      _
  $region6: #{bottleneck.2} parent=0 // loop_footer
    %s14 = sadd.s32 1, %s10
  $region7: #{bottleneck.2} parent=0 // loop_footer_branch
    %9 = sbr.rel target = $region3
  $region8: #{bottleneck.2} parent=0 // loop_exit
    _

// kernel: bottleneck.3
$region0: #{bottleneck.3}
  #allocation0 [shape = 'u32[]', space=smem, size = 0x4, offset = 0x4, fixed_abs, tag = 'smem constant byte address 0x4 - core index']
  #allocation1 [shape = 'u32[144,128]{1,0:T(1,128)}', space=vmem, size = 0x12000, scoped, tag = 'internal scratch']
  #allocation2 [shape = 'f32[256,128]{1,0:T(8,128)}', space=vmem, size = 0x20000, scoped, tag = 'scratch operand']
  %s0 = inlined_call_operand.vmem [shape: f32[9,512,128], index: 0, kind: input, shape index: {}]
  %s1 = inlined_call_operand.vmem [shape: f32[9,128,128], index: 1, kind: input, shape index: {}]
  %s2 = inlined_call_operand.vmem [shape: f32[1,128], index: 2, kind: input, shape index: {}]
  %s3 = inlined_call_operand.vmem [shape: f32[1,128], index: 3, kind: input, shape index: {}]
  %s4 = inlined_call_operand.vmem [shape: f32[512,128], index: 4, kind: input, shape index: {}]
  %s5 = inlined_call_operand.vmem [shape: f32[512,128], index: 5, kind: output, shape index: {}]
  %s6 = sld [smem:[#allocation0]]
  $region61: #{bottleneck.3} parent=0
    _
  %s8 = ssub.s32 1, %s6
  %s9 = scalar_select 0, %s8, %s6
  loop: start=0, step=1, limit=20
  $region2: #{bottleneck.3} parent=0 // loop_pre_header
    _
  $region3: #{bottleneck.3} parent=0 // loop_header
    %s11 = sphi 0, %s15
    %p12 = scmp.ge.s32.totalorder %s11, 20
    %s18 = sphi 0, %s30
    %s19 = sphi 0, %s26
    %s20 = sphi 0, %s18
    %s21 = sphi 0, %s19
    %s22 = sphi 0, %s20
    %s23 = sphi 0, %s21
    %s35 = sphi 0, %s37
    %s38 = sphi 0, %s35
    %s39 = sphi 0, %s38
    %s55 = sphi 0, %s39
    %s61 = sphi 0, %s63
    %s64 = sphi 0, %s61
    %s65 = sphi 0, %s64
    %s81 = sphi 0, %s65
    %s85 = sphi 0, %s85
    %s87 = sphi 0, %s85
    %s88 = sphi 0, %s87
    %s102 = sphi 0, %s88
    %s106 = sphi 0, %s106
    %s108 = sphi 0, %s106
    %s109 = sphi 0, %s108
    %s123 = sphi 0, %s109
    %s129 = sphi 0, %s131
    %s132 = sphi 0, %s129
    %s133 = sphi 0, %s132
    %s149 = sphi 0, %s133
    %s155 = sphi 0, %s157
    %s158 = sphi 0, %s155
    %s159 = sphi 0, %s158
    %s175 = sphi 0, %s159
  $region4: #{bottleneck.3} parent=0 // loop_header_branch
    %14 = sbr.rel (%p12) target = $region8
  $region5: #{bottleneck.3} parent=0 // loop_body
    %s16 = ssub.s32 %s11, 1
    %s17 = ssub.s32 %s11, 2
    %s24 = sadd.s32 1, %s19
    %p25 = scmp.ge.s32.totalorder %s24, 9
    %s26 = scalar_select %p25, 0, %s24
    %s27 = sadd.s32 1, %s18
    %s28 = scalar_select %p25, %s27, %s18
    %p29 = scmp.ge.s32.totalorder %s28, 2
    %s30 = scalar_select %p29, 0, %s28
    %s31 = ssub.s32 %s19, %s26
    %s32 = ssub.s32 %s18, %s30
    %s33 = sor.u32 %s31, %s32
    %p34 = scmp.eq.s32.totalorder %s33, 0
    %s36 = sadd.s32 %s35, 1
    %s37 = scalar_select %p34, %s35, %s36
    %p40 = pneg %p34
    %p41 = scmp.eq.s32.totalorder %s11, 17
    %p42 = por %p40, %p41
    %p43 = scmp.ne.s32.totalorder %s35, %s38
    %p44 = scmp.eq.s32.totalorder %s11, 0
    %p45 = por %p43, %p44
    %p46 = scmp.ne.s32.totalorder %s35, %s38
    %p47 = scmp.eq.s32.totalorder %s16, 17
    %p48 = por %p46, %p47
    %p49 = scmp.ne.s32.totalorder %s38, %s39
    %p50 = scmp.eq.s32.totalorder %s16, 0
    %p51 = por %p49, %p50
    %p52 = scmp.ne.s32.totalorder %s38, %s39
    %p53 = scmp.eq.s32.totalorder %s17, 17
    %p54 = por %p52, %p53
    %p56 = scmp.ne.s32.totalorder %s39, %s55
    %p57 = scmp.eq.s32.totalorder %s17, 0
    %p58 = por %p56, %p57
    %s59 = ssub.s32 %s19, %s26
    %p60 = scmp.eq.s32.totalorder %s59, 0
    %s62 = sadd.s32 %s61, 1
    %s63 = scalar_select %p60, %s61, %s62
    %p66 = pneg %p60
    %p67 = scmp.eq.s32.totalorder %s11, 17
    %p68 = por %p66, %p67
    %p69 = scmp.ne.s32.totalorder %s61, %s64
    %p70 = scmp.eq.s32.totalorder %s11, 0
    %p71 = por %p69, %p70
    %p72 = scmp.ne.s32.totalorder %s61, %s64
    %p73 = scmp.eq.s32.totalorder %s16, 17
    %p74 = por %p72, %p73
    %p75 = scmp.ne.s32.totalorder %s64, %s65
    %p76 = scmp.eq.s32.totalorder %s16, 0
    %p77 = por %p75, %p76
    %p78 = scmp.ne.s32.totalorder %s64, %s65
    %p79 = scmp.eq.s32.totalorder %s17, 17
    %p80 = por %p78, %p79
    %p82 = scmp.ne.s32.totalorder %s65, %s81
    %p83 = scmp.eq.s32.totalorder %s17, 0
    %p84 = por %p82, %p83
    %s86 = sadd.s32 %s85, 1
    %p89 = scmp.eq.s32.totalorder %s11, 17
    %p90 = scmp.ne.s32.totalorder %s85, %s87
    %p91 = scmp.eq.s32.totalorder %s11, 0
    %p92 = por %p90, %p91
    %p93 = scmp.ne.s32.totalorder %s85, %s87
    %p94 = scmp.eq.s32.totalorder %s16, 17
    %p95 = por %p93, %p94
    %p96 = scmp.ne.s32.totalorder %s87, %s88
    %p97 = scmp.eq.s32.totalorder %s16, 0
    %p98 = por %p96, %p97
    %p99 = scmp.ne.s32.totalorder %s87, %s88
    %p100 = scmp.eq.s32.totalorder %s17, 17
    %p101 = por %p99, %p100
    %p103 = scmp.ne.s32.totalorder %s88, %s102
    %p104 = scmp.eq.s32.totalorder %s17, 0
    %p105 = por %p103, %p104
    %s107 = sadd.s32 %s106, 1
    %p110 = scmp.eq.s32.totalorder %s11, 17
    %p111 = scmp.ne.s32.totalorder %s106, %s108
    %p112 = scmp.eq.s32.totalorder %s11, 0
    %p113 = por %p111, %p112
    %p114 = scmp.ne.s32.totalorder %s106, %s108
    %p115 = scmp.eq.s32.totalorder %s16, 17
    %p116 = por %p114, %p115
    %p117 = scmp.ne.s32.totalorder %s108, %s109
    %p118 = scmp.eq.s32.totalorder %s16, 0
    %p119 = por %p117, %p118
    %p120 = scmp.ne.s32.totalorder %s108, %s109
    %p121 = scmp.eq.s32.totalorder %s17, 17
    %p122 = por %p120, %p121
    %p124 = scmp.ne.s32.totalorder %s109, %s123
    %p125 = scmp.eq.s32.totalorder %s17, 0
    %p126 = por %p124, %p125
    %s127 = ssub.s32 %s18, %s30
    %p128 = scmp.eq.s32.totalorder %s127, 0
    %s130 = sadd.s32 %s129, 1
    %s131 = scalar_select %p128, %s129, %s130
    %p134 = pneg %p128
    %p135 = scmp.eq.s32.totalorder %s11, 17
    %p136 = por %p134, %p135
    %p137 = scmp.ne.s32.totalorder %s129, %s132
    %p138 = scmp.eq.s32.totalorder %s11, 0
    %p139 = por %p137, %p138
    %p140 = scmp.ne.s32.totalorder %s129, %s132
    %p141 = scmp.eq.s32.totalorder %s16, 17
    %p142 = por %p140, %p141
    %p143 = scmp.ne.s32.totalorder %s132, %s133
    %p144 = scmp.eq.s32.totalorder %s16, 0
    %p145 = por %p143, %p144
    %p146 = scmp.ne.s32.totalorder %s132, %s133
    %p147 = scmp.eq.s32.totalorder %s17, 17
    %p148 = por %p146, %p147
    %p150 = scmp.ne.s32.totalorder %s133, %s149
    %p151 = scmp.eq.s32.totalorder %s17, 0
    %p152 = por %p150, %p151
    %s153 = ssub.s32 %s18, %s30
    %p154 = scmp.eq.s32.totalorder %s153, 0
    %s156 = sadd.s32 %s155, 1
    %s157 = scalar_select %p154, %s155, %s156
    %p160 = pneg %p154
    %p161 = scmp.eq.s32.totalorder %s11, 17
    %p162 = por %p160, %p161
    %p163 = scmp.ne.s32.totalorder %s155, %s158
    %p164 = scmp.eq.s32.totalorder %s11, 0
    %p165 = por %p163, %p164
    %p166 = scmp.ne.s32.totalorder %s155, %s158
    %p167 = scmp.eq.s32.totalorder %s16, 17
    %p168 = por %p166, %p167
    %p169 = scmp.ne.s32.totalorder %s158, %s159
    %p170 = scmp.eq.s32.totalorder %s16, 0
    %p171 = por %p169, %p170
    %p172 = scmp.ne.s32.totalorder %s158, %s159
    %p173 = scmp.eq.s32.totalorder %s17, 17
    %p174 = por %p172, %p173
    %p176 = scmp.ne.s32.totalorder %s159, %s175
    %p177 = scmp.eq.s32.totalorder %s17, 0
    %p178 = por %p176, %p177
    %p179 = scmp.le.s32.totalorder 1, %s11
    %p180 = scmp.lt.s32.totalorder %s11, 19
    %p181 = pnand %p179, %p180
    %p182 = pneg %p181
    // Predicated region
    $region9: #{bottleneck.3} parent=5 // pred_check
      _
    $region10: #{bottleneck.3} parent=5 // pred_check_branch
      %184 = sbr.rel (%p181) target = $region12
    $region11: #{bottleneck.3} parent=5 // pred_region
      %s185 = ssub.s32 %s11, 1
      // Predicated region
      $region13: #{bottleneck.3} parent=11 // pred_check
        %p186 = pneg %p98
      $region14: #{bottleneck.3} parent=11 // pred_check_branch
        %188 = sbr.rel (%p186) target = $region16
      $region15: #{bottleneck.3} parent=11 // pred_region
        _
      $region16: #{bottleneck.3} parent=11 // pred_fallthru
        _
      // Predicated region
      $region17: #{bottleneck.3} parent=11 // pred_check
        %p189 = pneg %p119
      $region18: #{bottleneck.3} parent=11 // pred_check_branch
        %191 = sbr.rel (%p189) target = $region20
      $region19: #{bottleneck.3} parent=11 // pred_region
        _
      $region20: #{bottleneck.3} parent=11 // pred_fallthru
        _
    $region12: #{bottleneck.3} parent=5 // pred_fallthru
      _
    %p192 = scmp.lt.s32.totalorder %s11, 18
    // Predicated region
    $region21: #{bottleneck.3} parent=5 // pred_check
      %p193 = pneg %p192
    $region22: #{bottleneck.3} parent=5 // pred_check_branch
      %195 = sbr.rel (%p193) target = $region24
    $region23: #{bottleneck.3} parent=5 // pred_region
      // Predicated region
      $region25: #{bottleneck.3} parent=23 // pred_check
        %p196 = pneg %p45
      $region26: #{bottleneck.3} parent=23 // pred_check_branch
        %198 = sbr.rel (%p196) target = $region28
      $region27: #{bottleneck.3} parent=23 // pred_region
        %s199 = smul.u32 32, %s18
        %p200 = scmp.lt.s32.totalorder %s19, 8
        %s201 = scalar_select %p200, %s19, 8
        %p202 = scmp.lt.s32.totalorder %s199, 63
        %s203 = scalar_select %p202, %s199, 63
        %s204 = smul.addr %s201, 64
        %s205 = sadd.s32 %s203, %s204
        %s206 = smul.addr %s205, 8
        %s207 = scalar_lea.vmem %s0, %s206
        %s208 = smul.u32 32, %s18
      $region28: #{bottleneck.3} parent=23 // pred_fallthru
        _
      // Predicated region
      $region29: #{bottleneck.3} parent=23 // pred_check
        %p209 = pneg %p71
      $region30: #{bottleneck.3} parent=23 // pred_check_branch
        %211 = sbr.rel (%p209) target = $region32
      $region31: #{bottleneck.3} parent=23 // pred_region
        %p212 = scmp.lt.s32.totalorder %s19, 8
        %s213 = scalar_select %p212, %s19, 8
        %s214 = smul.addr %s213, 16
        %s215 = smul.addr %s214, 8
        %s216 = scalar_lea.vmem %s1, %s215
      $region32: #{bottleneck.3} parent=23 // pred_fallthru
        _
      // Predicated region
      $region33: #{bottleneck.3} parent=23 // pred_check
        %p217 = pneg %p139
      $region34: #{bottleneck.3} parent=23 // pred_check_branch
        %219 = sbr.rel (%p217) target = $region36
      $region35: #{bottleneck.3} parent=23 // pred_region
        %s220 = smul.u32 32, %s18
        %p221 = scmp.lt.s32.totalorder %s220, 63
        %s222 = scalar_select %p221, %s220, 63
        %s223 = smul.addr %s222, 8
        %s224 = scalar_lea.vmem %s4, %s223
        %s225 = smul.u32 32, %s18
      $region36: #{bottleneck.3} parent=23 // pred_fallthru
        _
    $region24: #{bottleneck.3} parent=5 // pred_fallthru
      _
    %p226 = scmp.le.s32.totalorder 1, %s11
    %p227 = scmp.lt.s32.totalorder %s11, 19
    %p228 = pnand %p226, %p227
    %p229 = pneg %p228
    // Predicated region
    $region37: #{bottleneck.3} parent=5 // pred_check
      _
    $region38: #{bottleneck.3} parent=5 // pred_check_branch
      %231 = sbr.rel (%p228) target = $region40
    $region39: #{bottleneck.3} parent=5 // pred_region
      %s232 = ssub.s32 %s11, 1
      %s233 = smul.u32 32, %s20
      %p234 = scmp.lt.s32.totalorder %s21, 8
      %s235 = scalar_select %p234, %s21, 8
      %p236 = scmp.lt.s32.totalorder %s233, 63
      %s237 = scalar_select %p236, %s233, 63
      %s238 = smul.addr %s235, 64
      %s239 = sadd.s32 %s237, %s238
      %s240 = smul.addr %s239, 8
      %s241 = scalar_lea.vmem %s0, %s240
      %p242 = pneg %p51
      %p243 = pneg %p48
      %p244 = scmp.lt.s32.totalorder %s21, 8
      %s245 = scalar_select %p244, %s21, 8
      %s246 = smul.addr %s245, 16
      %s247 = smul.addr %s246, 8
      %s248 = scalar_lea.vmem %s1, %s247
      %p249 = pneg %p77
      %p250 = pneg %p74
      %p251 = pneg %p98
      %p252 = pneg %p95
      %p253 = pneg %p119
      %p254 = pneg %p116
      %s255 = smul.u32 32, %s20
      %p256 = scmp.lt.s32.totalorder %s255, 63
      %s257 = scalar_select %p256, %s255, 63
      %s258 = smul.addr %s257, 8
      %s259 = scalar_lea.vmem %s4, %s258
      %p260 = pneg %p145
      %p261 = pneg %p142
      %p262 = pneg %p171
      %p263 = pneg %p168
      %s264 = smul.u32 32, %s20
      %p265 = scmp.lt.s32.totalorder %s264, 63
      %s266 = scalar_select %p265, %s264, 63
      %s267 = smul.addr %s266, 8
      %s268 = scalar_lea.vmem %s5, %s267
      %s269 = smul.u32 32, %s20
      %p270 = scmp.lt.s32.totalorder %s21, 8
      %s271 = scalar_select %p270, %s21, 8
      %p272 = scmp.lt.s32.totalorder %s269, 63
      %s273 = scalar_select %p272, %s269, 63
      %s274 = smul.addr %s271, 64
      %s275 = sadd.s32 %s273, %s274
      %s276 = smul.addr %s275, 8
      %s277 = scalar_lea.vmem %s0, %s276
      %s278 = smul.u32 32, %s20
      %p279 = scmp.lt.s32.totalorder %s21, 8
      %s280 = scalar_select %p279, %s21, 8
      %s281 = smul.addr %s280, 16
      %s282 = smul.addr %s281, 8
      %s283 = scalar_lea.vmem %s1, %s282
      %s284 = smul.u32 32, %s20
      %p285 = scmp.lt.s32.totalorder %s284, 63
      %s286 = scalar_select %p285, %s284, 63
      %s287 = smul.addr %s286, 8
      %s288 = scalar_lea.vmem %s4, %s287
      %s289 = smul.u32 32, %s20
      %s290 = smul.u32 32, %s20
      %p291 = scmp.lt.s32.totalorder %s290, 63
      %s292 = scalar_select %p291, %s290, 63
      %s293 = smul.addr %s292, 8
      %s294 = scalar_lea.vmem %s5, %s293
      %s295 = smul.u32 32, %s20
      %p296 = scmp.eq.s32.totalorder %s21, 0
      // Predicated region
      $region41: #{bottleneck.3} parent=39 // pred_check
        %p297 = pneg %p296
      $region42: #{bottleneck.3} parent=39 // pred_check_branch
        %299 = sbr.rel (%p297) target = $region44
      $region43: #{bottleneck.3} parent=39 // pred_region
        %300 = vst [vmem:[#allocation2] sm:$0xff] 0.0
        %301 = vst [vmem:[#allocation2 + $0x8] sm:$0xff] 0.0
        %302 = vst [vmem:[#allocation2 + $0x10] sm:$0xff] 0.0
        %303 = vst [vmem:[#allocation2 + $0x18] sm:$0xff] 0.0
        %304 = vst [vmem:[#allocation2 + $0x20] sm:$0xff] 0.0
        %305 = vst [vmem:[#allocation2 + $0x28] sm:$0xff] 0.0
        %306 = vst [vmem:[#allocation2 + $0x30] sm:$0xff] 0.0
        %307 = vst [vmem:[#allocation2 + $0x38] sm:$0xff] 0.0
        %308 = vst [vmem:[#allocation2 + $0x40] sm:$0xff] 0.0
        %309 = vst [vmem:[#allocation2 + $0x48] sm:$0xff] 0.0
        %310 = vst [vmem:[#allocation2 + $0x50] sm:$0xff] 0.0
        %311 = vst [vmem:[#allocation2 + $0x58] sm:$0xff] 0.0
        %312 = vst [vmem:[#allocation2 + $0x60] sm:$0xff] 0.0
        %313 = vst [vmem:[#allocation2 + $0x68] sm:$0xff] 0.0
        %314 = vst [vmem:[#allocation2 + $0x70] sm:$0xff] 0.0
        %315 = vst [vmem:[#allocation2 + $0x78] sm:$0xff] 0.0
        %316 = vst [vmem:[#allocation2 + $0x80] sm:$0xff] 0.0
        %317 = vst [vmem:[#allocation2 + $0x88] sm:$0xff] 0.0
        %318 = vst [vmem:[#allocation2 + $0x90] sm:$0xff] 0.0
        %319 = vst [vmem:[#allocation2 + $0x98] sm:$0xff] 0.0
        %320 = vst [vmem:[#allocation2 + $0xa0] sm:$0xff] 0.0
        %321 = vst [vmem:[#allocation2 + $0xa8] sm:$0xff] 0.0
        %322 = vst [vmem:[#allocation2 + $0xb0] sm:$0xff] 0.0
        %323 = vst [vmem:[#allocation2 + $0xb8] sm:$0xff] 0.0
        %324 = vst [vmem:[#allocation2 + $0xc0] sm:$0xff] 0.0
        %325 = vst [vmem:[#allocation2 + $0xc8] sm:$0xff] 0.0
        %326 = vst [vmem:[#allocation2 + $0xd0] sm:$0xff] 0.0
        %327 = vst [vmem:[#allocation2 + $0xd8] sm:$0xff] 0.0
        %328 = vst [vmem:[#allocation2 + $0xe0] sm:$0xff] 0.0
        %329 = vst [vmem:[#allocation2 + $0xe8] sm:$0xff] 0.0
        %330 = vst [vmem:[#allocation2 + $0xf0] sm:$0xff] 0.0
        %331 = vst [vmem:[#allocation2 + $0xf8] sm:$0xff] 0.0
      $region44: #{bottleneck.3} parent=39 // pred_fallthru
        _
      %v332 = vld [vmem:[#allocation2] sm:$0xff]
      %v333 = vld [vmem:[#allocation2 + $0x8] sm:$0xff]
      %v334 = vld [vmem:[#allocation2 + $0x10] sm:$0xff]
      %v335 = vld [vmem:[#allocation2 + $0x18] sm:$0xff]
      %v336 = vld [vmem:[#allocation2 + $0x20] sm:$0xff]
      %v337 = vld [vmem:[#allocation2 + $0x28] sm:$0xff]
      %v338 = vld [vmem:[#allocation2 + $0x30] sm:$0xff]
      %v339 = vld [vmem:[#allocation2 + $0x38] sm:$0xff]
      %v340 = vld [vmem:[#allocation2 + $0x40] sm:$0xff]
      %v341 = vld [vmem:[#allocation2 + $0x48] sm:$0xff]
      %v342 = vld [vmem:[#allocation2 + $0x50] sm:$0xff]
      %v343 = vld [vmem:[#allocation2 + $0x58] sm:$0xff]
      %v344 = vld [vmem:[#allocation2 + $0x60] sm:$0xff]
      %v345 = vld [vmem:[#allocation2 + $0x68] sm:$0xff]
      %v346 = vld [vmem:[#allocation2 + $0x70] sm:$0xff]
      %v347 = vld [vmem:[#allocation2 + $0x78] sm:$0xff]
      %v348 = vld [vmem:[#allocation2 + $0x80] sm:$0xff]
      %v349 = vld [vmem:[#allocation2 + $0x88] sm:$0xff]
      %v350 = vld [vmem:[#allocation2 + $0x90] sm:$0xff]
      %v351 = vld [vmem:[#allocation2 + $0x98] sm:$0xff]
      %v352 = vld [vmem:[#allocation2 + $0xa0] sm:$0xff]
      %v353 = vld [vmem:[#allocation2 + $0xa8] sm:$0xff]
      %v354 = vld [vmem:[#allocation2 + $0xb0] sm:$0xff]
      %v355 = vld [vmem:[#allocation2 + $0xb8] sm:$0xff]
      %v356 = vld [vmem:[#allocation2 + $0xc0] sm:$0xff]
      %v357 = vld [vmem:[#allocation2 + $0xc8] sm:$0xff]
      %v358 = vld [vmem:[#allocation2 + $0xd0] sm:$0xff]
      %v359 = vld [vmem:[#allocation2 + $0xd8] sm:$0xff]
      %v360 = vld [vmem:[#allocation2 + $0xe0] sm:$0xff]
      %v361 = vld [vmem:[#allocation2 + $0xe8] sm:$0xff]
      %v362 = vld [vmem:[#allocation2 + $0xf0] sm:$0xff]
      %v363 = vld [vmem:[#allocation2 + $0xf8] sm:$0xff]
      %v364 = vld [vmem:[%s277] sm:$0xff]
      %v365 = vld [vmem:[%s277 + $0x8] sm:$0xff]
      %v366 = vld [vmem:[%s277 + $0x10] sm:$0xff]
      %v367 = vld [vmem:[%s277 + $0x18] sm:$0xff]
      %v368 = vld [vmem:[%s277 + $0x20] sm:$0xff]
      %v369 = vld [vmem:[%s277 + $0x28] sm:$0xff]
      %v370 = vld [vmem:[%s277 + $0x30] sm:$0xff]
      %v371 = vld [vmem:[%s277 + $0x38] sm:$0xff]
      %v372 = vld [vmem:[%s277 + $0x40] sm:$0xff]
      %v373 = vld [vmem:[%s277 + $0x48] sm:$0xff]
      %v374 = vld [vmem:[%s277 + $0x50] sm:$0xff]
      %v375 = vld [vmem:[%s277 + $0x58] sm:$0xff]
      %v376 = vld [vmem:[%s277 + $0x60] sm:$0xff]
      %v377 = vld [vmem:[%s277 + $0x68] sm:$0xff]
      %v378 = vld [vmem:[%s277 + $0x70] sm:$0xff]
      %v379 = vld [vmem:[%s277 + $0x78] sm:$0xff]
      %v380 = vld [vmem:[%s277 + $0x80] sm:$0xff]
      %v381 = vld [vmem:[%s277 + $0x88] sm:$0xff]
      %v382 = vld [vmem:[%s277 + $0x90] sm:$0xff]
      %v383 = vld [vmem:[%s277 + $0x98] sm:$0xff]
      %v384 = vld [vmem:[%s277 + $0xa0] sm:$0xff]
      %v385 = vld [vmem:[%s277 + $0xa8] sm:$0xff]
      %v386 = vld [vmem:[%s277 + $0xb0] sm:$0xff]
      %v387 = vld [vmem:[%s277 + $0xb8] sm:$0xff]
      %v388 = vld [vmem:[%s277 + $0xc0] sm:$0xff]
      %v389 = vld [vmem:[%s277 + $0xc8] sm:$0xff]
      %v390 = vld [vmem:[%s277 + $0xd0] sm:$0xff]
      %v391 = vld [vmem:[%s277 + $0xd8] sm:$0xff]
      %v392 = vld [vmem:[%s277 + $0xe0] sm:$0xff]
      %v393 = vld [vmem:[%s277 + $0xe8] sm:$0xff]
      %v394 = vld [vmem:[%s277 + $0xf0] sm:$0xff]
      %v395 = vld [vmem:[%s277 + $0xf8] sm:$0xff]
      %v396 = vld [vmem:[%s283] sm:$0xff]
      %v397 = vld [vmem:[%s283 + $0x8] sm:$0xff]
      %v398 = vld [vmem:[%s283 + $0x10] sm:$0xff]
      %v399 = vld [vmem:[%s283 + $0x18] sm:$0xff]
      %v400 = vld [vmem:[%s283 + $0x20] sm:$0xff]
      %v401 = vld [vmem:[%s283 + $0x28] sm:$0xff]
      %v402 = vld [vmem:[%s283 + $0x30] sm:$0xff]
      %v403 = vld [vmem:[%s283 + $0x38] sm:$0xff]
      %v404 = vld [vmem:[%s283 + $0x40] sm:$0xff]
      %v405 = vld [vmem:[%s283 + $0x48] sm:$0xff]
      %v406 = vld [vmem:[%s283 + $0x50] sm:$0xff]
      %v407 = vld [vmem:[%s283 + $0x58] sm:$0xff]
      %v408 = vld [vmem:[%s283 + $0x60] sm:$0xff]
      %v409 = vld [vmem:[%s283 + $0x68] sm:$0xff]
      %v410 = vld [vmem:[%s283 + $0x70] sm:$0xff]
      %v411 = vld [vmem:[%s283 + $0x78] sm:$0xff]
      %412 = vmatprep.subr.mxu0 0.0
      %413 = vmatpush1.msra.mxu0 %v396
      %414 = vmatprep.subr.mxu0 0.0
      %415 = vmatpush1.msra.mxu0 %v397
      %416 = vmatprep.subr.mxu0 0.0
      %417 = vmatpush1.msra.mxu0 %v398
      %418 = vmatprep.subr.mxu0 0.0
      %419 = vmatpush1.msra.mxu0 %v399
      %420 = vmatprep.subr.mxu0 0.0
      %421 = vmatpush1.msra.mxu0 %v400
      %422 = vmatprep.subr.mxu0 0.0
      %423 = vmatpush1.msra.mxu0 %v401
      %424 = vmatprep.subr.mxu0 0.0
      %425 = vmatpush1.msra.mxu0 %v402
      %426 = vmatprep.subr.mxu0 0.0
      %427 = vmatpush1.msra.mxu0 %v403
      %428 = vmatprep.subr.mxu0 0.0
      %429 = vmatpush1.msra.mxu0 %v404
      %430 = vmatprep.subr.mxu0 0.0
      %431 = vmatpush1.msra.mxu0 %v405
      %432 = vmatprep.subr.mxu0 0.0
      %433 = vmatpush1.msra.mxu0 %v406
      %434 = vmatprep.subr.mxu0 0.0
      %435 = vmatpush1.msra.mxu0 %v407
      %436 = vmatprep.subr.mxu0 0.0
      %437 = vmatpush1.msra.mxu0 %v408
      %438 = vmatprep.subr.mxu0 0.0
      %439 = vmatpush1.msra.mxu0 %v409
      %440 = vmatprep.subr.mxu0 0.0
      %441 = vmatpush1.msra.mxu0 %v410
      %442 = vmatprep.subr.mxu0 0.0
      %443 = vmatpush1.msra.mxu0 %v411
      %444 = vmatprep.subr.mxu0 0.0
      %445 = vmatpush1.msra.mxu0 0.0
      %446 = vmatprep.subr.mxu0 0.0
      %447 = vmatpush1.msra.mxu0 0.0
      %448 = vmatprep.subr.mxu0 0.0
      %449 = vmatpush1.msra.mxu0 0.0
      %450 = vmatprep.subr.mxu0 0.0
      %451 = vmatpush1.msra.mxu0 0.0
      %452 = vmatprep.subr.mxu0 0.0
      %453 = vmatpush1.msra.mxu0 0.0
      %454 = vmatprep.subr.mxu0 0.0
      %455 = vmatpush1.msra.mxu0 0.0
      %456 = vmatprep.subr.mxu0 0.0
      %457 = vmatpush1.msra.mxu0 0.0
      %458 = vmatprep.subr.mxu0 0.0
      %459 = vmatpush1.msra.mxu0 0.0
      %460 = vmatprep.subr.mxu0 0.0
      %461 = vmatpush1.msra.mxu0 0.0
      %462 = vmatprep.subr.mxu0 0.0
      %463 = vmatpush1.msra.mxu0 0.0
      %464 = vmatprep.subr.mxu0 0.0
      %465 = vmatpush1.msra.mxu0 0.0
      %466 = vmatprep.subr.mxu0 0.0
      %467 = vmatpush1.msra.mxu0 0.0
      %468 = vmatprep.subr.mxu0 0.0
      %469 = vmatpush1.msra.mxu0 0.0
      %470 = vmatprep.subr.mxu0 0.0
      %471 = vmatpush1.msra.mxu0 0.0
      %472 = vmatprep.subr.mxu0 0.0
      %473 = vmatpush1.msra.mxu0 0.0
      %474 = vmatprep.subr.mxu0 0.0
      %475 = vmatpush1.msra.mxu0 0.0
      %476 = vmatprep.mubr.f32.mxu0 0.0
      %477 = vmatmul.mubr.f32.gmra.mrb[0].mxu0 %v364
      %v478 = vpop.f32.mrb[0].mxu0
      %v479 = vadd.f32 0.0, %v478
      %v480 = vpop.f32.mrb[0].mxu0
      %481 = vmatprep.mubr.f32.mxu0 0.0
      %482 = vmatmul.mubr.f32.gmra.mrb[0].mxu0 %v365
      %v483 = vpop.f32.mrb[0].mxu0
      %v484 = vadd.f32 0.0, %v483
      %v485 = vpop.f32.mrb[0].mxu0
      %486 = vmatprep.mubr.f32.mxu0 0.0
      %487 = vmatmul.mubr.f32.gmra.mrb[0].mxu0 %v366
      %v488 = vpop.f32.mrb[0].mxu0
      %v489 = vadd.f32 0.0, %v488
      %v490 = vpop.f32.mrb[0].mxu0
      %491 = vmatprep.mubr.f32.mxu0 0.0
      %492 = vmatmul.mubr.f32.gmra.mrb[0].mxu0 %v367
      %v493 = vpop.f32.mrb[0].mxu0
      %v494 = vadd.f32 0.0, %v493
      %v495 = vpop.f32.mrb[0].mxu0
      %496 = vmatprep.mubr.f32.mxu0 0.0
      %497 = vmatmul.mubr.f32.gmra.mrb[0].mxu0 %v368
      %v498 = vpop.f32.mrb[0].mxu0
      %v499 = vadd.f32 0.0, %v498
      %v500 = vpop.f32.mrb[0].mxu0
      %501 = vmatprep.mubr.f32.mxu0 0.0
      %502 = vmatmul.mubr.f32.gmra.mrb[0].mxu0 %v369
      %v503 = vpop.f32.mrb[0].mxu0
      %v504 = vadd.f32 0.0, %v503
      %v505 = vpop.f32.mrb[0].mxu0
      %506 = vmatprep.mubr.f32.mxu0 0.0
      %507 = vmatmul.mubr.f32.gmra.mrb[0].mxu0 %v370
      %v508 = vpop.f32.mrb[0].mxu0
      %v509 = vadd.f32 0.0, %v508
      %v510 = vpop.f32.mrb[0].mxu0
      %511 = vmatprep.mubr.f32.mxu0 0.0
      %512 = vmatmul.mubr.f32.gmra.mrb[0].mxu0 %v371
      %v513 = vpop.f32.mrb[0].mxu0
      %v514 = vadd.f32 0.0, %v513
      %v515 = vpop.f32.mrb[0].mxu0
      %516 = vmatprep.mubr.f32.mxu0 0.0
      %517 = vmatmul.mubr.f32.gmra.mrb[0].mxu0 %v372
      %v518 = vpop.f32.mrb[0].mxu0
      %v519 = vadd.f32 0.0, %v518
      %v520 = vpop.f32.mrb[0].mxu0
      %521 = vmatprep.mubr.f32.mxu0 0.0
      %522 = vmatmul.mubr.f32.gmra.mrb[0].mxu0 %v373
      %v523 = vpop.f32.mrb[0].mxu0
      %v524 = vadd.f32 0.0, %v523
      %v525 = vpop.f32.mrb[0].mxu0
      %526 = vmatprep.mubr.f32.mxu0 0.0
      %527 = vmatmul.mubr.f32.gmra.mrb[0].mxu0 %v374
      %v528 = vpop.f32.mrb[0].mxu0
      %v529 = vadd.f32 0.0, %v528
      %v530 = vpop.f32.mrb[0].mxu0
      %531 = vmatprep.mubr.f32.mxu0 0.0
      %532 = vmatmul.mubr.f32.gmra.mrb[0].mxu0 %v375
      %v533 = vpop.f32.mrb[0].mxu0
      %v534 = vadd.f32 0.0, %v533
      %v535 = vpop.f32.mrb[0].mxu0
      %536 = vmatprep.mubr.f32.mxu0 0.0
      %537 = vmatmul.mubr.f32.gmra.mrb[0].mxu0 %v376
      %v538 = vpop.f32.mrb[0].mxu0
      %v539 = vadd.f32 0.0, %v538
      %v540 = vpop.f32.mrb[0].mxu0
      %541 = vmatprep.mubr.f32.mxu0 0.0
      %542 = vmatmul.mubr.f32.gmra.mrb[0].mxu0 %v377
      %v543 = vpop.f32.mrb[0].mxu0
      %v544 = vadd.f32 0.0, %v543
      %v545 = vpop.f32.mrb[0].mxu0
      %546 = vmatprep.mubr.f32.mxu0 0.0
      %547 = vmatmul.mubr.f32.gmra.mrb[0].mxu0 %v378
      %v548 = vpop.f32.mrb[0].mxu0
      %v549 = vadd.f32 0.0, %v548
      %v550 = vpop.f32.mrb[0].mxu0
      %551 = vmatprep.mubr.f32.mxu0 0.0
      %552 = vmatmul.mubr.f32.gmra.mrb[0].mxu0 %v379
      %v553 = vpop.f32.mrb[0].mxu0
      %v554 = vadd.f32 0.0, %v553
      %v555 = vpop.f32.mrb[0].mxu0
      %556 = vmatprep.mubr.f32.mxu0 0.0
      %557 = vmatmul.mubr.f32.gmra.mrb[0].mxu0 %v380
      %v558 = vpop.f32.mrb[0].mxu0
      %v559 = vadd.f32 0.0, %v558
      %v560 = vpop.f32.mrb[0].mxu0
      %561 = vmatprep.mubr.f32.mxu0 0.0
      %562 = vmatmul.mubr.f32.gmra.mrb[0].mxu0 %v381
      %v563 = vpop.f32.mrb[0].mxu0
      %v564 = vadd.f32 0.0, %v563
      %v565 = vpop.f32.mrb[0].mxu0
      %566 = vmatprep.mubr.f32.mxu0 0.0
      %567 = vmatmul.mubr.f32.gmra.mrb[0].mxu0 %v382
      %v568 = vpop.f32.mrb[0].mxu0
      %v569 = vadd.f32 0.0, %v568
      %v570 = vpop.f32.mrb[0].mxu0
      %571 = vmatprep.mubr.f32.mxu0 0.0
      %572 = vmatmul.mubr.f32.gmra.mrb[0].mxu0 %v383
      %v573 = vpop.f32.mrb[0].mxu0
      %v574 = vadd.f32 0.0, %v573
      %v575 = vpop.f32.mrb[0].mxu0
      %576 = vmatprep.mubr.f32.mxu0 0.0
      %577 = vmatmul.mubr.f32.gmra.mrb[0].mxu0 %v384
      %v578 = vpop.f32.mrb[0].mxu0
      %v579 = vadd.f32 0.0, %v578
      %v580 = vpop.f32.mrb[0].mxu0
      %581 = vmatprep.mubr.f32.mxu0 0.0
      %582 = vmatmul.mubr.f32.gmra.mrb[0].mxu0 %v385
      %v583 = vpop.f32.mrb[0].mxu0
      %v584 = vadd.f32 0.0, %v583
      %v585 = vpop.f32.mrb[0].mxu0
      %586 = vmatprep.mubr.f32.mxu0 0.0
      %587 = vmatmul.mubr.f32.gmra.mrb[0].mxu0 %v386
      %v588 = vpop.f32.mrb[0].mxu0
      %v589 = vadd.f32 0.0, %v588
      %v590 = vpop.f32.mrb[0].mxu0
      %591 = vmatprep.mubr.f32.mxu0 0.0
      %592 = vmatmul.mubr.f32.gmra.mrb[0].mxu0 %v387
      %v593 = vpop.f32.mrb[0].mxu0
      %v594 = vadd.f32 0.0, %v593
      %v595 = vpop.f32.mrb[0].mxu0
      %596 = vmatprep.mubr.f32.mxu0 0.0
      %597 = vmatmul.mubr.f32.gmra.mrb[0].mxu0 %v388
      %v598 = vpop.f32.mrb[0].mxu0
      %v599 = vadd.f32 0.0, %v598
      %v600 = vpop.f32.mrb[0].mxu0
      %601 = vmatprep.mubr.f32.mxu0 0.0
      %602 = vmatmul.mubr.f32.gmra.mrb[0].mxu0 %v389
      %v603 = vpop.f32.mrb[0].mxu0
      %v604 = vadd.f32 0.0, %v603
      %v605 = vpop.f32.mrb[0].mxu0
      %606 = vmatprep.mubr.f32.mxu0 0.0
      %607 = vmatmul.mubr.f32.gmra.mrb[0].mxu0 %v390
      %v608 = vpop.f32.mrb[0].mxu0
      %v609 = vadd.f32 0.0, %v608
      %v610 = vpop.f32.mrb[0].mxu0
      %611 = vmatprep.mubr.f32.mxu0 0.0
      %612 = vmatmul.mubr.f32.gmra.mrb[0].mxu0 %v391
      %v613 = vpop.f32.mrb[0].mxu0
      %v614 = vadd.f32 0.0, %v613
      %v615 = vpop.f32.mrb[0].mxu0
      %616 = vmatprep.mubr.f32.mxu0 0.0
      %617 = vmatmul.mubr.f32.gmra.mrb[0].mxu0 %v392
      %v618 = vpop.f32.mrb[0].mxu0
      %v619 = vadd.f32 0.0, %v618
      %v620 = vpop.f32.mrb[0].mxu0
      %621 = vmatprep.mubr.f32.mxu0 0.0
      %622 = vmatmul.mubr.f32.gmra.mrb[0].mxu0 %v393
      %v623 = vpop.f32.mrb[0].mxu0
      %v624 = vadd.f32 0.0, %v623
      %v625 = vpop.f32.mrb[0].mxu0
      %626 = vmatprep.mubr.f32.mxu0 0.0
      %627 = vmatmul.mubr.f32.gmra.mrb[0].mxu0 %v394
      %v628 = vpop.f32.mrb[0].mxu0
      %v629 = vadd.f32 0.0, %v628
      %v630 = vpop.f32.mrb[0].mxu0
      %631 = vmatprep.mubr.f32.mxu0 0.0
      %632 = vmatmul.mubr.f32.gmra.mrb[0].mxu0 %v395
      %v633 = vpop.f32.mrb[0].mxu0
      %v634 = vadd.f32 0.0, %v633
      %v635 = vpop.f32.mrb[0].mxu0
      %636 = vdwg.mxu0
      %v637 = vadd.f32 %v332, %v479
      %v638 = vadd.f32 %v333, %v484
      %v639 = vadd.f32 %v334, %v489
      %v640 = vadd.f32 %v335, %v494
      %v641 = vadd.f32 %v336, %v499
      %v642 = vadd.f32 %v337, %v504
      %v643 = vadd.f32 %v338, %v509
      %v644 = vadd.f32 %v339, %v514
      %v645 = vadd.f32 %v340, %v519
      %v646 = vadd.f32 %v341, %v524
      %v647 = vadd.f32 %v342, %v529
      %v648 = vadd.f32 %v343, %v534
      %v649 = vadd.f32 %v344, %v539
      %v650 = vadd.f32 %v345, %v544
      %v651 = vadd.f32 %v346, %v549
      %v652 = vadd.f32 %v347, %v554
      %v653 = vadd.f32 %v348, %v559
      %v654 = vadd.f32 %v349, %v564
      %v655 = vadd.f32 %v350, %v569
      %v656 = vadd.f32 %v351, %v574
      %v657 = vadd.f32 %v352, %v579
      %v658 = vadd.f32 %v353, %v584
      %v659 = vadd.f32 %v354, %v589
      %v660 = vadd.f32 %v355, %v594
      %v661 = vadd.f32 %v356, %v599
      %v662 = vadd.f32 %v357, %v604
      %v663 = vadd.f32 %v358, %v609
      %v664 = vadd.f32 %v359, %v614
      %v665 = vadd.f32 %v360, %v619
      %v666 = vadd.f32 %v361, %v624
      %v667 = vadd.f32 %v362, %v629
      %v668 = vadd.f32 %v363, %v634
      %669 = vst [vmem:[#allocation2] sm:$0xff] %v637
      %670 = vst [vmem:[#allocation2 + $0x8] sm:$0xff] %v638
      %671 = vst [vmem:[#allocation2 + $0x10] sm:$0xff] %v639
      %672 = vst [vmem:[#allocation2 + $0x18] sm:$0xff] %v640
      %673 = vst [vmem:[#allocation2 + $0x20] sm:$0xff] %v641
      %674 = vst [vmem:[#allocation2 + $0x28] sm:$0xff] %v642
      %675 = vst [vmem:[#allocation2 + $0x30] sm:$0xff] %v643
      %676 = vst [vmem:[#allocation2 + $0x38] sm:$0xff] %v644
      %677 = vst [vmem:[#allocation2 + $0x40] sm:$0xff] %v645
      %678 = vst [vmem:[#allocation2 + $0x48] sm:$0xff] %v646
      %679 = vst [vmem:[#allocation2 + $0x50] sm:$0xff] %v647
      %680 = vst [vmem:[#allocation2 + $0x58] sm:$0xff] %v648
      %681 = vst [vmem:[#allocation2 + $0x60] sm:$0xff] %v649
      %682 = vst [vmem:[#allocation2 + $0x68] sm:$0xff] %v650
      %683 = vst [vmem:[#allocation2 + $0x70] sm:$0xff] %v651
      %684 = vst [vmem:[#allocation2 + $0x78] sm:$0xff] %v652
      %685 = vst [vmem:[#allocation2 + $0x80] sm:$0xff] %v653
      %686 = vst [vmem:[#allocation2 + $0x88] sm:$0xff] %v654
      %687 = vst [vmem:[#allocation2 + $0x90] sm:$0xff] %v655
      %688 = vst [vmem:[#allocation2 + $0x98] sm:$0xff] %v656
      %689 = vst [vmem:[#allocation2 + $0xa0] sm:$0xff] %v657
      %690 = vst [vmem:[#allocation2 + $0xa8] sm:$0xff] %v658
      %691 = vst [vmem:[#allocation2 + $0xb0] sm:$0xff] %v659
      %692 = vst [vmem:[#allocation2 + $0xb8] sm:$0xff] %v660
      %693 = vst [vmem:[#allocation2 + $0xc0] sm:$0xff] %v661
      %694 = vst [vmem:[#allocation2 + $0xc8] sm:$0xff] %v662
      %695 = vst [vmem:[#allocation2 + $0xd0] sm:$0xff] %v663
      %696 = vst [vmem:[#allocation2 + $0xd8] sm:$0xff] %v664
      %697 = vst [vmem:[#allocation2 + $0xe0] sm:$0xff] %v665
      %698 = vst [vmem:[#allocation2 + $0xe8] sm:$0xff] %v666
      %699 = vst [vmem:[#allocation2 + $0xf0] sm:$0xff] %v667
      %700 = vst [vmem:[#allocation2 + $0xf8] sm:$0xff] %v668
      %p701 = scmp.eq.s32.totalorder %s21, 8
      // Predicated region
      $region45: #{bottleneck.3} parent=39 // pred_check
        %p702 = pneg %p701
      $region46: #{bottleneck.3} parent=39 // pred_check_branch
        %704 = sbr.rel (%p702) target = $region48
      $region47: #{bottleneck.3} parent=39 // pred_region
        %v705 = vld [vmem:[#allocation2] sm:$0xff]
        %v706 = vld [vmem:[#allocation2 + $0x8] sm:$0xff]
        %v707 = vld [vmem:[#allocation2 + $0x10] sm:$0xff]
        %v708 = vld [vmem:[#allocation2 + $0x18] sm:$0xff]
        %v709 = vld [vmem:[#allocation2 + $0x20] sm:$0xff]
        %v710 = vld [vmem:[#allocation2 + $0x28] sm:$0xff]
        %v711 = vld [vmem:[#allocation2 + $0x30] sm:$0xff]
        %v712 = vld [vmem:[#allocation2 + $0x38] sm:$0xff]
        %v713 = vld [vmem:[#allocation2 + $0x40] sm:$0xff]
        %v714 = vld [vmem:[#allocation2 + $0x48] sm:$0xff]
        %v715 = vld [vmem:[#allocation2 + $0x50] sm:$0xff]
        %v716 = vld [vmem:[#allocation2 + $0x58] sm:$0xff]
        %v717 = vld [vmem:[#allocation2 + $0x60] sm:$0xff]
        %v718 = vld [vmem:[#allocation2 + $0x68] sm:$0xff]
        %v719 = vld [vmem:[#allocation2 + $0x70] sm:$0xff]
        %v720 = vld [vmem:[#allocation2 + $0x78] sm:$0xff]
        %v721 = vld [vmem:[#allocation2 + $0x80] sm:$0xff]
        %v722 = vld [vmem:[#allocation2 + $0x88] sm:$0xff]
        %v723 = vld [vmem:[#allocation2 + $0x90] sm:$0xff]
        %v724 = vld [vmem:[#allocation2 + $0x98] sm:$0xff]
        %v725 = vld [vmem:[#allocation2 + $0xa0] sm:$0xff]
        %v726 = vld [vmem:[#allocation2 + $0xa8] sm:$0xff]
        %v727 = vld [vmem:[#allocation2 + $0xb0] sm:$0xff]
        %v728 = vld [vmem:[#allocation2 + $0xb8] sm:$0xff]
        %v729 = vld [vmem:[#allocation2 + $0xc0] sm:$0xff]
        %v730 = vld [vmem:[#allocation2 + $0xc8] sm:$0xff]
        %v731 = vld [vmem:[#allocation2 + $0xd0] sm:$0xff]
        %v732 = vld [vmem:[#allocation2 + $0xd8] sm:$0xff]
        %v733 = vld [vmem:[#allocation2 + $0xe0] sm:$0xff]
        %v734 = vld [vmem:[#allocation2 + $0xe8] sm:$0xff]
        %v735 = vld [vmem:[#allocation2 + $0xf0] sm:$0xff]
        %v736 = vld [vmem:[#allocation2 + $0xf8] sm:$0xff]
        %v737 = vld [vmem:[%s2] sm:$0x1]
        %v739 = vlaneseq
        %v740 = vshrl.u32 %v739, 7
        %v741 = vsub.s32 0, %v740
        %v742 = vrot.slane %v737, %v741
        %v744 = vmul.f32 %v705, %v742
        %v745 = vmul.f32 %v706, %v742
        %v746 = vmul.f32 %v707, %v742
        %v747 = vmul.f32 %v708, %v742
        %v748 = vmul.f32 %v709, %v742
        %v749 = vmul.f32 %v710, %v742
        %v750 = vmul.f32 %v711, %v742
        %v751 = vmul.f32 %v712, %v742
        %v752 = vmul.f32 %v713, %v742
        %v753 = vmul.f32 %v714, %v742
        %v754 = vmul.f32 %v715, %v742
        %v755 = vmul.f32 %v716, %v742
        %v756 = vmul.f32 %v717, %v742
        %v757 = vmul.f32 %v718, %v742
        %v758 = vmul.f32 %v719, %v742
        %v759 = vmul.f32 %v720, %v742
        %v760 = vmul.f32 %v721, %v742
        %v761 = vmul.f32 %v722, %v742
        %v762 = vmul.f32 %v723, %v742
        %v763 = vmul.f32 %v724, %v742
        %v764 = vmul.f32 %v725, %v742
        %v765 = vmul.f32 %v726, %v742
        %v766 = vmul.f32 %v727, %v742
        %v767 = vmul.f32 %v728, %v742
        %v768 = vmul.f32 %v729, %v742
        %v769 = vmul.f32 %v730, %v742
        %v770 = vmul.f32 %v731, %v742
        %v771 = vmul.f32 %v732, %v742
        %v772 = vmul.f32 %v733, %v742
        %v773 = vmul.f32 %v734, %v742
        %v774 = vmul.f32 %v735, %v742
        %v775 = vmul.f32 %v736, %v742
        %v776 = vld [vmem:[%s3] sm:$0x1]
        %v778 = vlaneseq
        %v779 = vshrl.u32 %v778, 7
        %v780 = vsub.s32 0, %v779
        %v781 = vrot.slane %v776, %v780
        %v783 = vadd.f32 %v744, %v781
        %v784 = vadd.f32 %v745, %v781
        %v785 = vadd.f32 %v746, %v781
        %v786 = vadd.f32 %v747, %v781
        %v787 = vadd.f32 %v748, %v781
        %v788 = vadd.f32 %v749, %v781
        %v789 = vadd.f32 %v750, %v781
        %v790 = vadd.f32 %v751, %v781
        %v791 = vadd.f32 %v752, %v781
        %v792 = vadd.f32 %v753, %v781
        %v793 = vadd.f32 %v754, %v781
        %v794 = vadd.f32 %v755, %v781
        %v795 = vadd.f32 %v756, %v781
        %v796 = vadd.f32 %v757, %v781
        %v797 = vadd.f32 %v758, %v781
        %v798 = vadd.f32 %v759, %v781
        %v799 = vadd.f32 %v760, %v781
        %v800 = vadd.f32 %v761, %v781
        %v801 = vadd.f32 %v762, %v781
        %v802 = vadd.f32 %v763, %v781
        %v803 = vadd.f32 %v764, %v781
        %v804 = vadd.f32 %v765, %v781
        %v805 = vadd.f32 %v766, %v781
        %v806 = vadd.f32 %v767, %v781
        %v807 = vadd.f32 %v768, %v781
        %v808 = vadd.f32 %v769, %v781
        %v809 = vadd.f32 %v770, %v781
        %v810 = vadd.f32 %v771, %v781
        %v811 = vadd.f32 %v772, %v781
        %v812 = vadd.f32 %v773, %v781
        %v813 = vadd.f32 %v774, %v781
        %v814 = vadd.f32 %v775, %v781
        %v815 = vsub.f32 0.0, %v783
        %v816 = vsub.f32 0.0, %v784
        %v817 = vsub.f32 0.0, %v785
        %v818 = vsub.f32 0.0, %v786
        %v819 = vsub.f32 0.0, %v787
        %v820 = vsub.f32 0.0, %v788
        %v821 = vsub.f32 0.0, %v789
        %v822 = vsub.f32 0.0, %v790
        %v823 = vsub.f32 0.0, %v791
        %v824 = vsub.f32 0.0, %v792
        %v825 = vsub.f32 0.0, %v793
        %v826 = vsub.f32 0.0, %v794
        %v827 = vsub.f32 0.0, %v795
        %v828 = vsub.f32 0.0, %v796
        %v829 = vsub.f32 0.0, %v797
        %v830 = vsub.f32 0.0, %v798
        %v831 = vsub.f32 0.0, %v799
        %v832 = vsub.f32 0.0, %v800
        %v833 = vsub.f32 0.0, %v801
        %v834 = vsub.f32 0.0, %v802
        %v835 = vsub.f32 0.0, %v803
        %v836 = vsub.f32 0.0, %v804
        %v837 = vsub.f32 0.0, %v805
        %v838 = vsub.f32 0.0, %v806
        %v839 = vsub.f32 0.0, %v807
        %v840 = vsub.f32 0.0, %v808
        %v841 = vsub.f32 0.0, %v809
        %v842 = vsub.f32 0.0, %v810
        %v843 = vsub.f32 0.0, %v811
        %v844 = vsub.f32 0.0, %v812
        %v845 = vsub.f32 0.0, %v813
        %v846 = vsub.f32 0.0, %v814
        %v847 = vmul.f32 %v815, 1.442695
        %v848 = vpow.pop %v847
        %v849 = vmul.f32 %v816, 1.442695
        %v850 = vpow.pop %v849
        %v851 = vmul.f32 %v817, 1.442695
        %v852 = vpow.pop %v851
        %v853 = vmul.f32 %v818, 1.442695
        %v854 = vpow.pop %v853
        %v855 = vmul.f32 %v819, 1.442695
        %v856 = vpow.pop %v855
        %v857 = vmul.f32 %v820, 1.442695
        %v858 = vpow.pop %v857
        %v859 = vmul.f32 %v821, 1.442695
        %v860 = vpow.pop %v859
        %v861 = vmul.f32 %v822, 1.442695
        %v862 = vpow.pop %v861
        %v863 = vmul.f32 %v823, 1.442695
        %v864 = vpow.pop %v863
        %v865 = vmul.f32 %v824, 1.442695
        %v866 = vpow.pop %v865
        %v867 = vmul.f32 %v825, 1.442695
        %v868 = vpow.pop %v867
        %v869 = vmul.f32 %v826, 1.442695
        %v870 = vpow.pop %v869
        %v871 = vmul.f32 %v827, 1.442695
        %v872 = vpow.pop %v871
        %v873 = vmul.f32 %v828, 1.442695
        %v874 = vpow.pop %v873
        %v875 = vmul.f32 %v829, 1.442695
        %v876 = vpow.pop %v875
        %v877 = vmul.f32 %v830, 1.442695
        %v878 = vpow.pop %v877
        %v879 = vmul.f32 %v831, 1.442695
        %v880 = vpow.pop %v879
        %v881 = vmul.f32 %v832, 1.442695
        %v882 = vpow.pop %v881
        %v883 = vmul.f32 %v833, 1.442695
        %v884 = vpow.pop %v883
        %v885 = vmul.f32 %v834, 1.442695
        %v886 = vpow.pop %v885
        %v887 = vmul.f32 %v835, 1.442695
        %v888 = vpow.pop %v887
        %v889 = vmul.f32 %v836, 1.442695
        %v890 = vpow.pop %v889
        %v891 = vmul.f32 %v837, 1.442695
        %v892 = vpow.pop %v891
        %v893 = vmul.f32 %v838, 1.442695
        %v894 = vpow.pop %v893
        %v895 = vmul.f32 %v839, 1.442695
        %v896 = vpow.pop %v895
        %v897 = vmul.f32 %v840, 1.442695
        %v898 = vpow.pop %v897
        %v899 = vmul.f32 %v841, 1.442695
        %v900 = vpow.pop %v899
        %v901 = vmul.f32 %v842, 1.442695
        %v902 = vpow.pop %v901
        %v903 = vmul.f32 %v843, 1.442695
        %v904 = vpow.pop %v903
        %v905 = vmul.f32 %v844, 1.442695
        %v906 = vpow.pop %v905
        %v907 = vmul.f32 %v845, 1.442695
        %v908 = vpow.pop %v907
        %v909 = vmul.f32 %v846, 1.442695
        %v910 = vpow.pop %v909
        %v911 = vadd.f32 %v848, 1.0
        %v912 = vadd.f32 %v850, 1.0
        %v913 = vadd.f32 %v852, 1.0
        %v914 = vadd.f32 %v854, 1.0
        %v915 = vadd.f32 %v856, 1.0
        %v916 = vadd.f32 %v858, 1.0
        %v917 = vadd.f32 %v860, 1.0
        %v918 = vadd.f32 %v862, 1.0
        %v919 = vadd.f32 %v864, 1.0
        %v920 = vadd.f32 %v866, 1.0
        %v921 = vadd.f32 %v868, 1.0
        %v922 = vadd.f32 %v870, 1.0
        %v923 = vadd.f32 %v872, 1.0
        %v924 = vadd.f32 %v874, 1.0
        %v925 = vadd.f32 %v876, 1.0
        %v926 = vadd.f32 %v878, 1.0
        %v927 = vadd.f32 %v880, 1.0
        %v928 = vadd.f32 %v882, 1.0
        %v929 = vadd.f32 %v884, 1.0
        %v930 = vadd.f32 %v886, 1.0
        %v931 = vadd.f32 %v888, 1.0
        %v932 = vadd.f32 %v890, 1.0
        %v933 = vadd.f32 %v892, 1.0
        %v934 = vadd.f32 %v894, 1.0
        %v935 = vadd.f32 %v896, 1.0
        %v936 = vadd.f32 %v898, 1.0
        %v937 = vadd.f32 %v900, 1.0
        %v938 = vadd.f32 %v902, 1.0
        %v939 = vadd.f32 %v904, 1.0
        %v940 = vadd.f32 %v906, 1.0
        %v941 = vadd.f32 %v908, 1.0
        %v942 = vadd.f32 %v910, 1.0
        %v943 = vrcp.pop %v911
        %v944 = vmul.f32 1.0, %v943
        %v945 = vrcp.pop %v912
        %v946 = vmul.f32 1.0, %v945
        %v947 = vrcp.pop %v913
        %v948 = vmul.f32 1.0, %v947
        %v949 = vrcp.pop %v914
        %v950 = vmul.f32 1.0, %v949
        %v951 = vrcp.pop %v915
        %v952 = vmul.f32 1.0, %v951
        %v953 = vrcp.pop %v916
        %v954 = vmul.f32 1.0, %v953
        %v955 = vrcp.pop %v917
        %v956 = vmul.f32 1.0, %v955
        %v957 = vrcp.pop %v918
        %v958 = vmul.f32 1.0, %v957
        %v959 = vrcp.pop %v919
        %v960 = vmul.f32 1.0, %v959
        %v961 = vrcp.pop %v920
        %v962 = vmul.f32 1.0, %v961
        %v963 = vrcp.pop %v921
        %v964 = vmul.f32 1.0, %v963
        %v965 = vrcp.pop %v922
        %v966 = vmul.f32 1.0, %v965
        %v967 = vrcp.pop %v923
        %v968 = vmul.f32 1.0, %v967
        %v969 = vrcp.pop %v924
        %v970 = vmul.f32 1.0, %v969
        %v971 = vrcp.pop %v925
        %v972 = vmul.f32 1.0, %v971
        %v973 = vrcp.pop %v926
        %v974 = vmul.f32 1.0, %v973
        %v975 = vrcp.pop %v927
        %v976 = vmul.f32 1.0, %v975
        %v977 = vrcp.pop %v928
        %v978 = vmul.f32 1.0, %v977
        %v979 = vrcp.pop %v929
        %v980 = vmul.f32 1.0, %v979
        %v981 = vrcp.pop %v930
        %v982 = vmul.f32 1.0, %v981
        %v983 = vrcp.pop %v931
        %v984 = vmul.f32 1.0, %v983
        %v985 = vrcp.pop %v932
        %v986 = vmul.f32 1.0, %v985
        %v987 = vrcp.pop %v933
        %v988 = vmul.f32 1.0, %v987
        %v989 = vrcp.pop %v934
        %v990 = vmul.f32 1.0, %v989
        %v991 = vrcp.pop %v935
        %v992 = vmul.f32 1.0, %v991
        %v993 = vrcp.pop %v936
        %v994 = vmul.f32 1.0, %v993
        %v995 = vrcp.pop %v937
        %v996 = vmul.f32 1.0, %v995
        %v997 = vrcp.pop %v938
        %v998 = vmul.f32 1.0, %v997
        %v999 = vrcp.pop %v939
        %v1000 = vmul.f32 1.0, %v999
        %v1001 = vrcp.pop %v940
        %v1002 = vmul.f32 1.0, %v1001
        %v1003 = vrcp.pop %v941
        %v1004 = vmul.f32 1.0, %v1003
        %v1005 = vrcp.pop %v942
        %v1006 = vmul.f32 1.0, %v1005
        %v1007 = vmul.f32 %v783, %v944
        %v1008 = vmul.f32 %v784, %v946
        %v1009 = vmul.f32 %v785, %v948
        %v1010 = vmul.f32 %v786, %v950
        %v1011 = vmul.f32 %v787, %v952
        %v1012 = vmul.f32 %v788, %v954
        %v1013 = vmul.f32 %v789, %v956
        %v1014 = vmul.f32 %v790, %v958
        %v1015 = vmul.f32 %v791, %v960
        %v1016 = vmul.f32 %v792, %v962
        %v1017 = vmul.f32 %v793, %v964
        %v1018 = vmul.f32 %v794, %v966
        %v1019 = vmul.f32 %v795, %v968
        %v1020 = vmul.f32 %v796, %v970
        %v1021 = vmul.f32 %v797, %v972
        %v1022 = vmul.f32 %v798, %v974
        %v1023 = vmul.f32 %v799, %v976
        %v1024 = vmul.f32 %v800, %v978
        %v1025 = vmul.f32 %v801, %v980
        %v1026 = vmul.f32 %v802, %v982
        %v1027 = vmul.f32 %v803, %v984
        %v1028 = vmul.f32 %v804, %v986
        %v1029 = vmul.f32 %v805, %v988
        %v1030 = vmul.f32 %v806, %v990
        %v1031 = vmul.f32 %v807, %v992
        %v1032 = vmul.f32 %v808, %v994
        %v1033 = vmul.f32 %v809, %v996
        %v1034 = vmul.f32 %v810, %v998
        %v1035 = vmul.f32 %v811, %v1000
        %v1036 = vmul.f32 %v812, %v1002
        %v1037 = vmul.f32 %v813, %v1004
        %v1038 = vmul.f32 %v814, %v1006
        %v1039 = vld [vmem:[%s288] sm:$0xff]
        %v1040 = vld [vmem:[%s288 + $0x8] sm:$0xff]
        %v1041 = vld [vmem:[%s288 + $0x10] sm:$0xff]
        %v1042 = vld [vmem:[%s288 + $0x18] sm:$0xff]
        %v1043 = vld [vmem:[%s288 + $0x20] sm:$0xff]
        %v1044 = vld [vmem:[%s288 + $0x28] sm:$0xff]
        %v1045 = vld [vmem:[%s288 + $0x30] sm:$0xff]
        %v1046 = vld [vmem:[%s288 + $0x38] sm:$0xff]
        %v1047 = vld [vmem:[%s288 + $0x40] sm:$0xff]
        %v1048 = vld [vmem:[%s288 + $0x48] sm:$0xff]
        %v1049 = vld [vmem:[%s288 + $0x50] sm:$0xff]
        %v1050 = vld [vmem:[%s288 + $0x58] sm:$0xff]
        %v1051 = vld [vmem:[%s288 + $0x60] sm:$0xff]
        %v1052 = vld [vmem:[%s288 + $0x68] sm:$0xff]
        %v1053 = vld [vmem:[%s288 + $0x70] sm:$0xff]
        %v1054 = vld [vmem:[%s288 + $0x78] sm:$0xff]
        %v1055 = vld [vmem:[%s288 + $0x80] sm:$0xff]
        %v1056 = vld [vmem:[%s288 + $0x88] sm:$0xff]
        %v1057 = vld [vmem:[%s288 + $0x90] sm:$0xff]
        %v1058 = vld [vmem:[%s288 + $0x98] sm:$0xff]
        %v1059 = vld [vmem:[%s288 + $0xa0] sm:$0xff]
        %v1060 = vld [vmem:[%s288 + $0xa8] sm:$0xff]
        %v1061 = vld [vmem:[%s288 + $0xb0] sm:$0xff]
        %v1062 = vld [vmem:[%s288 + $0xb8] sm:$0xff]
        %v1063 = vld [vmem:[%s288 + $0xc0] sm:$0xff]
        %v1064 = vld [vmem:[%s288 + $0xc8] sm:$0xff]
        %v1065 = vld [vmem:[%s288 + $0xd0] sm:$0xff]
        %v1066 = vld [vmem:[%s288 + $0xd8] sm:$0xff]
        %v1067 = vld [vmem:[%s288 + $0xe0] sm:$0xff]
        %v1068 = vld [vmem:[%s288 + $0xe8] sm:$0xff]
        %v1069 = vld [vmem:[%s288 + $0xf0] sm:$0xff]
        %v1070 = vld [vmem:[%s288 + $0xf8] sm:$0xff]
        %v1071 = vadd.f32 %v1007, %v1039
        %v1072 = vadd.f32 %v1008, %v1040
        %v1073 = vadd.f32 %v1009, %v1041
        %v1074 = vadd.f32 %v1010, %v1042
        %v1075 = vadd.f32 %v1011, %v1043
        %v1076 = vadd.f32 %v1012, %v1044
        %v1077 = vadd.f32 %v1013, %v1045
        %v1078 = vadd.f32 %v1014, %v1046
        %v1079 = vadd.f32 %v1015, %v1047
        %v1080 = vadd.f32 %v1016, %v1048
        %v1081 = vadd.f32 %v1017, %v1049
        %v1082 = vadd.f32 %v1018, %v1050
        %v1083 = vadd.f32 %v1019, %v1051
        %v1084 = vadd.f32 %v1020, %v1052
        %v1085 = vadd.f32 %v1021, %v1053
        %v1086 = vadd.f32 %v1022, %v1054
        %v1087 = vadd.f32 %v1023, %v1055
        %v1088 = vadd.f32 %v1024, %v1056
        %v1089 = vadd.f32 %v1025, %v1057
        %v1090 = vadd.f32 %v1026, %v1058
        %v1091 = vadd.f32 %v1027, %v1059
        %v1092 = vadd.f32 %v1028, %v1060
        %v1093 = vadd.f32 %v1029, %v1061
        %v1094 = vadd.f32 %v1030, %v1062
        %v1095 = vadd.f32 %v1031, %v1063
        %v1096 = vadd.f32 %v1032, %v1064
        %v1097 = vadd.f32 %v1033, %v1065
        %v1098 = vadd.f32 %v1034, %v1066
        %v1099 = vadd.f32 %v1035, %v1067
        %v1100 = vadd.f32 %v1036, %v1068
        %v1101 = vadd.f32 %v1037, %v1069
        %v1102 = vadd.f32 %v1038, %v1070
        %1103 = vst [vmem:[%s294] sm:$0xff] %v1071
        %1104 = vst [vmem:[%s294 + $0x8] sm:$0xff] %v1072
        %1105 = vst [vmem:[%s294 + $0x10] sm:$0xff] %v1073
        %1106 = vst [vmem:[%s294 + $0x18] sm:$0xff] %v1074
        %1107 = vst [vmem:[%s294 + $0x20] sm:$0xff] %v1075
        %1108 = vst [vmem:[%s294 + $0x28] sm:$0xff] %v1076
        %1109 = vst [vmem:[%s294 + $0x30] sm:$0xff] %v1077
        %1110 = vst [vmem:[%s294 + $0x38] sm:$0xff] %v1078
        %1111 = vst [vmem:[%s294 + $0x40] sm:$0xff] %v1079
        %1112 = vst [vmem:[%s294 + $0x48] sm:$0xff] %v1080
        %1113 = vst [vmem:[%s294 + $0x50] sm:$0xff] %v1081
        %1114 = vst [vmem:[%s294 + $0x58] sm:$0xff] %v1082
        %1115 = vst [vmem:[%s294 + $0x60] sm:$0xff] %v1083
        %1116 = vst [vmem:[%s294 + $0x68] sm:$0xff] %v1084
        %1117 = vst [vmem:[%s294 + $0x70] sm:$0xff] %v1085
        %1118 = vst [vmem:[%s294 + $0x78] sm:$0xff] %v1086
        %1119 = vst [vmem:[%s294 + $0x80] sm:$0xff] %v1087
        %1120 = vst [vmem:[%s294 + $0x88] sm:$0xff] %v1088
        %1121 = vst [vmem:[%s294 + $0x90] sm:$0xff] %v1089
        %1122 = vst [vmem:[%s294 + $0x98] sm:$0xff] %v1090
        %1123 = vst [vmem:[%s294 + $0xa0] sm:$0xff] %v1091
        %1124 = vst [vmem:[%s294 + $0xa8] sm:$0xff] %v1092
        %1125 = vst [vmem:[%s294 + $0xb0] sm:$0xff] %v1093
        %1126 = vst [vmem:[%s294 + $0xb8] sm:$0xff] %v1094
        %1127 = vst [vmem:[%s294 + $0xc0] sm:$0xff] %v1095
        %1128 = vst [vmem:[%s294 + $0xc8] sm:$0xff] %v1096
        %1129 = vst [vmem:[%s294 + $0xd0] sm:$0xff] %v1097
        %1130 = vst [vmem:[%s294 + $0xd8] sm:$0xff] %v1098
        %1131 = vst [vmem:[%s294 + $0xe0] sm:$0xff] %v1099
        %1132 = vst [vmem:[%s294 + $0xe8] sm:$0xff] %v1100
        %1133 = vst [vmem:[%s294 + $0xf0] sm:$0xff] %v1101
        %1134 = vst [vmem:[%s294 + $0xf8] sm:$0xff] %v1102
      $region48: #{bottleneck.3} parent=39 // pred_fallthru
        _
      %s1135 = smul.u32 32, %s20
      %p1136 = scmp.lt.s32.totalorder %s1135, 63
      %s1137 = scalar_select %p1136, %s1135, 63
      %s1138 = smul.addr %s1137, 8
      %s1139 = scalar_lea.vmem %s5, %s1138
      // Predicated region
      $region49: #{bottleneck.3} parent=39 // pred_check
        %p1140 = pneg %p168
      $region50: #{bottleneck.3} parent=39 // pred_check_branch
        %1142 = sbr.rel (%p1140) target = $region52
      $region51: #{bottleneck.3} parent=39 // pred_region
        %s1143 = smul.u32 32, %s20
      $region52: #{bottleneck.3} parent=39 // pred_fallthru
        _
    $region40: #{bottleneck.3} parent=5 // pred_fallthru
      _
    %p1144 = scmp.le.s32.totalorder 2, %s11
    // Predicated region
    $region53: #{bottleneck.3} parent=5 // pred_check
      %p1145 = pneg %p1144
    $region54: #{bottleneck.3} parent=5 // pred_check_branch
      %1147 = sbr.rel (%p1145) target = $region56
    $region55: #{bottleneck.3} parent=5 // pred_region
      %s1148 = ssub.s32 %s11, 2
      // Predicated region
      $region57: #{bottleneck.3} parent=55 // pred_check
        %p1149 = pneg %p174
      $region58: #{bottleneck.3} parent=55 // pred_check_branch
        %1151 = sbr.rel (%p1149) target = $region60
      $region59: #{bottleneck.3} parent=55 // pred_region
        %s1152 = smul.u32 32, %s22
        %p1153 = scmp.lt.s32.totalorder %s1152, 63
        %s1154 = scalar_select %p1153, %s1152, 63
        %s1155 = smul.addr %s1154, 8
        %s1156 = scalar_lea.vmem %s5, %s1155
      $region60: #{bottleneck.3} parent=55 // pred_fallthru
        _
    $region56: #{bottleneck.3} parent=5 // pred_fallthru
      _
  $region6: #{bottleneck.3} parent=0 // loop_footer
    %s15 = sadd.s32 1, %s11
  $region7: #{bottleneck.3} parent=0 // loop_footer_branch
    %10 = sbr.rel target = $region3
  $region8: #{bottleneck.3} parent=0 // loop_exit
    _

</llo_original>
